<compile_context>
chip_gen: v7x
topology: tpu7x:2x2x1
jax: 0.10.0
libtpu: 0.0.40
codegen_flags: <defaults>
</compile_context>

<pallas_src>
import functools

import jax
import jax.numpy as jnp
from jax.experimental import pallas as pl
from jax.experimental.pallas import tpu as pltpu

MXU_DTYPE = jnp.float32   # jnp.bfloat16 on v6e/v7x for large shapes (accuracy note above)


# -----------------------------------------------------------------------------
# Fused kernel: one batch sample (one z|x slab) per grid step.
#   x1_ref : (1, 9*Cin, span1)  host-built layer-1 im2col of the flattened z|x slab
#   w1_ref : (C1, 9*Cin)   b1_ref : (C1, 1)
#   w2_ref : (C2, 9*C1)    b2_ref : (C2, 1)
#   o_ref  : (1, C2, OUT_LANES) pre-reduction xcorr accumulator (lane-dense store)
# -----------------------------------------------------------------------------
def _siamese_fused_kernel(x1_ref, w1_ref, b1_ref, w2_ref, b2_ref, o_ref,
                          *, hz, wz, wx):
    c1 = w1_ref.shape[0]
    span1 = x1_ref.shape[-1]
    span2 = span1 - (2 * wx + 2)            # layer-2 output span (frame stride = wx)
    offs = tuple(kh * wx + kw for kh in range(3) for kw in range(3))
    base = hz * wx                          # lane offset of the x frame inside the slab
    thz, twz = hz - 4, wz - 4               # template feature-map size
    out_lanes = o_ref.shape[-1]
    # static invariant: every xcorr slice below is in-bounds (sized by the wrapper)
    assert span2 >= base + (thz - 1) * wx + (twz - 1) + out_lanes

    # ---- layer 1: single MXU dot, K = 9*Cin (im2col built host-side) ----
    y1 = jnp.dot(w1_ref[...].astype(MXU_DTYPE), x1_ref[0].astype(MXU_DTYPE),
                 preferred_element_type=jnp.float32)
    y1 = jnp.maximum(y1 + b1_ref[...], 0.0)                       # (C1, span1)

    # ---- layer 2: in-kernel im2col (nine 8-row-aligned lane-shifted slices stacked
    #      on the sublane axis), then a single MXU dot with K = 9*C1 ----
    im2 = jnp.concatenate([y1[:, o:o + span2] for o in offs], axis=0)   # (9*C1, span2)
    assert im2.shape == (9 * c1, span2)
    y2 = jnp.dot(w2_ref[...].astype(MXU_DTYPE), im2.astype(MXU_DTYPE),
                 preferred_element_type=jnp.float32)
    y2 = jnp.maximum(y2 + b2_ref[...], 0.0)                       # (C2, span2)

    # ---- per-channel cross-correlation (template part of y2 over search part) ----
    # acc[c, p] = sum_{h,w} y2[c, h*wx+w] * y2[c, base + p + h*wx+w]
    # Per-template-row accumulators (short chains, small live set), tree-combined.
    row_accs = []
    for h in range(thz):
        acc_h = None
        for w in range(twz):
            off = h * wx + w
            zcol = y2[:, off:off + 1]                                   # (C2, 1)
            xsl = y2[:, base + off: base + off + out_lanes]             # (C2, OUT_LANES)
            term = zcol * xsl
            acc_h = term if acc_h is None else acc_h + term
        row_accs.append(acc_h)
    while len(row_accs) > 1:                                            # balanced tree
        nxt = [row_accs[i] + row_accs[i + 1] for i in range(0, len(row_accs) - 1, 2)]
        if len(row_accs) % 2:
            nxt.append(row_accs[-1])
        row_accs = nxt

    o_ref[0] = row_accs[0]      # full (C2, OUT_LANES) store: 8 sublanes x 2 vregs, unmasked


# -----------------------------------------------------------------------------
# One-time parameter repacking (hoisted out of the jitted forward).
# w*m column (kh*3 + kw)*Cin + ci  <->  w[o, ci, kh, kw]; matches the im2col row order.
# -----------------------------------------------------------------------------
def pack_params(params):
    w1, b1, w2, b2 = params["w1"], params["b1"], params["w2"], params["b2"]
    assert w1.shape[2:] == (3, 3) and w2.shape[2:] == (3, 3), "branch assumes 3x3 convs"
    c1, cin = w1.shape[:2]
    c2 = w2.shape[0]
    assert w2.shape[1] == c1
    return {
        "w1m": jnp.transpose(w1, (0, 2, 3, 1)).reshape(c1, 9 * cin),
        "b1c": b1.reshape(c1, 1),
        "w2m": jnp.transpose(w2, (0, 2, 3, 1)).reshape(c2, 9 * c1),
        "b2c": b2.reshape(c2, 1),
        "gamma": params["gamma"],
        "beta": params["beta"],
    }


# -----------------------------------------------------------------------------
# SiameseNet forward
# -----------------------------------------------------------------------------
@jax.jit
def siamese_forward(z, x, packed):
    assert z.shape[:2] == x.shape[:2]
    B, cin, hz, wz = z.shape
    _, _, hx, wx = x.shape
    # Static invariants the flattened-slab layout relies on (review correctness note 1).
    assert hz >= 5 and wz >= 5, "template must support two 3x3 VALID convs"
    assert hx >= hz and wx >= wz, "search region must contain the template"

    c1 = packed["w1m"].shape[0]
    c2 = packed["w2m"].shape[0]
    assert packed["w1m"].shape[1] == 9 * cin and packed["w2m"].shape[1] == 9 * c1

    # Output geometry (xcorr of the (hz-4,wz-4) template over the (hx-4,wx-4) search map).
    ho = (hx - 4) - (hz - 4) + 1
    wo = (wx - 4) - (wz - 4) + 1
    out_lanes = 128 * ((ho * wx + 127) // 128)              # lane-dense output width

    # Span bookkeeping: size every stage so all slices (incl. the 256-wide xcorr
    # windows) are statically in-bounds.  Extra columns hold harmless never-read values.
    span2 = hz * wx + (hz - 5) * wx + (wz - 5) + out_lanes  # layer-2 span
    span1 = span2 + 2 * wx + 2                              # layer-1 span
    slab_len = span1 + 2 * wx + 2                           # flattened slab length

    # ---- host-side layout plumbing (XLA ops, negligible vs kernel) ----
    # One lane-dense slab per sample: z (padded to the search width) stacked on top of
    # x along the row axis, rows flattened onto the 128-lane axis.
    z_pad = jnp.pad(z, ((0, 0), (0, 0), (0, 0), (0, wx - wz)))
    slab = jnp.concatenate([z_pad, x], axis=2).reshape(B, cin, (hz + hx) * wx)
    slab = jnp.pad(slab, ((0, 0), (0, 0), (0, slab_len - (hz + hx) * wx)))
    # Host-built layer-1 im2col: K = 9*cin real rows (no zero-padding waste).
    offs = [kh * wx + kw for kh in range(3) for kw in range(3)]
    x1 = jnp.concatenate([slab[:, :, o:o + span1] for o in offs], axis=1)  # (B,9*cin,span1)

    kernel = functools.partial(_siamese_fused_kernel, hz=hz, wz=wz, wx=wx)
    corr = pl.pallas_call(
        kernel,
        out_shape=jax.ShapeDtypeStruct((B, c2, out_lanes), jnp.float32),
        grid=(B,),
        in_specs=[
            pl.BlockSpec((1, 9 * cin, span1), lambda i: (i, 0, 0)),
            pl.BlockSpec((c1, 9 * cin), lambda i: (0, 0)),
            pl.BlockSpec((c1, 1), lambda i: (0, 0)),
            pl.BlockSpec((c2, 9 * c1), lambda i: (0, 0)),
            pl.BlockSpec((c2, 1), lambda i: (0, 0)),
        ],
        out_specs=pl.BlockSpec((1, c2, out_lanes), lambda i: (i, 0, 0)),
        compiler_params=pltpu.CompilerParams(dimension_semantics=("parallel",)),
    )(x1, packed["w1m"], packed["b1c"], packed["w2m"], packed["b2c"])

    # Channel reduction + valid-window extraction in the wrapper (keeps the in-kernel
    # store lane-dense and takes the cross-sublane reduce off the kernel's path).
    out = jnp.sum(corr, axis=1)[:, :ho * wx].reshape(B, ho, wx)[:, :, :wo]
    out = out[:, None]                                       # (B, 1, ho, wo)

    # Adjust2d(norm='bn') == BatchNorm2d(1) in training mode: whole-batch statistics,
    # biased variance, eps=1e-5.  Needs batch-global stats (conflicts with the
    # batch-parallel grid) and the map is ~650 B -> plain JAX, a kernel would be pure
    # launch/DMA overhead.
    mean = jnp.mean(out)
    var = jnp.mean(jnp.square(out - mean))
    out = (out - mean) * jax.lax.rsqrt(var + 1e-5)
    return out * packed["gamma"][0] + packed["beta"][0]


# -----------------------------------------------------------------------------
# Pure-JAX reference (correctness check for the fused kernel)
# -----------------------------------------------------------------------------
def ref_forward(z, x, params):
    def ref_branch(a):
        for w, b in ((params["w1"], params["b1"]), (params["w2"], params["b2"])):
            a = jax.lax.conv_general_dilated(
                a, w, (1, 1), "VALID", dimension_numbers=("NCHW", "OIHW", "NCHW"))
            a = jnp.maximum(a + b[None, :, None, None], 0.0)
        return a

    zf, xf = ref_branch(z), ref_branch(x)
    outs = []
    for i in range(zf.shape[0]):
        outs.append(jax.lax.conv_general_dilated(
            xf[i:i + 1], zf[i:i + 1], (1, 1), "VALID",
            dimension_numbers=("NCHW", "OIHW", "NCHW")))
    out = jnp.concatenate(outs, axis=0)
    mean = jnp.mean(out)
    var = jnp.mean((out - mean) ** 2)
    return (out - mean) * jax.lax.rsqrt(var + 1e-5) * params["gamma"][0] + params["beta"][0]


if __name__ == "__main__":
    key = jax.random.PRNGKey(0)
    kz, kx, k1, k2, k3, k4 = jax.random.split(key, 6)

    # Small SiamFC-style shapes: template z smaller than search region x.
    B, Cin = 2, 4
    z = jax.random.normal(kz, (B, Cin, 10, 10), jnp.float32)
    x = jax.random.normal(kx, (B, Cin, 18, 18), jnp.float32)

    params = {
        "w1": 0.1 * jax.random.normal(k1, (8, Cin, 3, 3), jnp.float32),
        "b1": 0.1 * jax.random.normal(k2, (8,), jnp.float32),
        "w2": 0.1 * jax.random.normal(k3, (8, 8, 3, 3), jnp.float32),
        "b2": 0.1 * jax.random.normal(k4, (8,), jnp.float32),
        "gamma": jnp.ones((1,), jnp.float32),
        "beta": jnp.zeros((1,), jnp.float32),
    }

    packed = pack_params(params)            # one-time repack, outside the jitted forward

    out = jax.block_until_ready(siamese_forward(z, x, packed))
    ref = jax.block_until_ready(ref_forward(z, x, params))

    assert out.shape == (B, 1, 9, 9), out.shape
    # Tolerance covers MXU f32 pass / accumulation-order differences vs the XLA convs.
    assert jnp.allclose(out, ref, rtol=1e-3, atol=1e-3), float(jnp.max(jnp.abs(out - ref)))

    print("KERNEL_OK")
</pallas_src>

<mosaic_0001>
module attributes {stable_mosaic.version = 11 : i64} {
  func.func @_siamese_fused_kernel(%arg0: i32, %arg1: memref<1x36x569xf32, #tpu.memory_space<vmem>>, %arg2: memref<8x36xf32, #tpu.memory_space<vmem>>, %arg3: memref<8x1xf32, #tpu.memory_space<vmem>>, %arg4: memref<8x72xf32, #tpu.memory_space<vmem>>, %arg5: memref<8x1xf32, #tpu.memory_space<vmem>>, %arg6: memref<1x8x256xf32, #tpu.memory_space<vmem>>) attributes {dimension_semantics = [#tpu.dimension_semantics<parallel>], iteration_bounds = array<i64: 2>, scalar_prefetch = 0 : i64, scratch_operands = 0 : i64, tpu.core_type = #tpu.core_type<tc>, window_params = [{transform_indices = @transform_0, window_bounds = array<i64: 1, 36, 569>}, {pipeline_mode = #tpu.pipeline_mode<synchronous>, transform_indices = @transform_1, window_bounds = array<i64: 8, 36>}, {pipeline_mode = #tpu.pipeline_mode<synchronous>, transform_indices = @transform_2, window_bounds = array<i64: 8, 1>}, {pipeline_mode = #tpu.pipeline_mode<synchronous>, transform_indices = @transform_3, window_bounds = array<i64: 8, 72>}, {pipeline_mode = #tpu.pipeline_mode<synchronous>, transform_indices = @transform_4, window_bounds = array<i64: 8, 1>}, {transform_indices = @transform_5, window_bounds = array<i64: 1, 8, 256>}]} {
    %c0 = arith.constant 0 : index
    %c0_0 = arith.constant 0 : index
    %0 = vector.load %arg2[%c0, %c0_0] : memref<8x36xf32, #tpu.memory_space<vmem>>, vector<8x36xf32>
    %c0_1 = arith.constant 0 : index
    %c0_2 = arith.constant 0 : index
    %c0_3 = arith.constant 0 : index
    %1 = vector.load %arg1[%c0_1, %c0_2, %c0_3] : memref<1x36x569xf32, #tpu.memory_space<vmem>>, vector<1x36x569xf32>
    %2 = vector.shape_cast %1 : vector<1x36x569xf32> to vector<36x569xf32>
    %cst = arith.constant dense<0.000000e+00> : vector<8x569xf32>
    %3 = tpu.matmul %0, %2, %cst {dimension_numbers = #tpu.dot_dimension_numbers<[1], [0], [0], [1], [0, 0, 1, 1], [], []>} : vector<8x36xf32>, vector<36x569xf32>, vector<8x569xf32> -> vector<8x569xf32>
    %c0_4 = arith.constant 0 : index
    %c0_5 = arith.constant 0 : index
    %4 = vector.load %arg3[%c0_4, %c0_5] : memref<8x1xf32, #tpu.memory_space<vmem>>, vector<8x1xf32>
    %5 = vector.broadcast %4 : vector<8x1xf32> to vector<8x569xf32>
    %6 = arith.addf %3, %5 : vector<8x569xf32>
    %cst_6 = arith.constant 0.000000e+00 : f32
    %7 = vector.broadcast %cst_6 : f32 to vector<8x569xf32>
    %8 = arith.maximumf %6, %7 : vector<8x569xf32>
    %9 = vector.extract_strided_slice %8 {offsets = [0, 0], sizes = [8, 531], strides = [1, 1]} : vector<8x569xf32> to vector<8x531xf32>
    %10 = vector.extract_strided_slice %8 {offsets = [0, 1], sizes = [8, 531], strides = [1, 1]} : vector<8x569xf32> to vector<8x531xf32>
    %11 = vector.extract_strided_slice %8 {offsets = [0, 2], sizes = [8, 531], strides = [1, 1]} : vector<8x569xf32> to vector<8x531xf32>
    %12 = vector.extract_strided_slice %8 {offsets = [0, 18], sizes = [8, 531], strides = [1, 1]} : vector<8x569xf32> to vector<8x531xf32>
    %13 = vector.extract_strided_slice %8 {offsets = [0, 19], sizes = [8, 531], strides = [1, 1]} : vector<8x569xf32> to vector<8x531xf32>
    %14 = vector.extract_strided_slice %8 {offsets = [0, 20], sizes = [8, 531], strides = [1, 1]} : vector<8x569xf32> to vector<8x531xf32>
    %15 = vector.extract_strided_slice %8 {offsets = [0, 36], sizes = [8, 531], strides = [1, 1]} : vector<8x569xf32> to vector<8x531xf32>
    %16 = vector.extract_strided_slice %8 {offsets = [0, 37], sizes = [8, 531], strides = [1, 1]} : vector<8x569xf32> to vector<8x531xf32>
    %17 = vector.extract_strided_slice %8 {offsets = [0, 38], sizes = [8, 531], strides = [1, 1]} : vector<8x569xf32> to vector<8x531xf32>
    %18 = tpu.concatenate %9, %10, %11, %12, %13, %14, %15, %16, %17 in 0 : vector<8x531xf32>, vector<8x531xf32>, vector<8x531xf32>, vector<8x531xf32>, vector<8x531xf32>, vector<8x531xf32>, vector<8x531xf32>, vector<8x531xf32>, vector<8x531xf32> -> vector<72x531xf32>
    %c0_7 = arith.constant 0 : index
    %c0_8 = arith.constant 0 : index
    %19 = vector.load %arg4[%c0_7, %c0_8] : memref<8x72xf32, #tpu.memory_space<vmem>>, vector<8x72xf32>
    %cst_9 = arith.constant dense<0.000000e+00> : vector<8x531xf32>
    %20 = tpu.matmul %19, %18, %cst_9 {dimension_numbers = #tpu.dot_dimension_numbers<[1], [0], [0], [1], [0, 0, 1, 1], [], []>} : vector<8x72xf32>, vector<72x531xf32>, vector<8x531xf32> -> vector<8x531xf32>
    %c0_10 = arith.constant 0 : index
    %c0_11 = arith.constant 0 : index
    %21 = vector.load %arg5[%c0_10, %c0_11] : memref<8x1xf32, #tpu.memory_space<vmem>>, vector<8x1xf32>
    %22 = vector.broadcast %21 : vector<8x1xf32> to vector<8x531xf32>
    %23 = arith.addf %20, %22 : vector<8x531xf32>
    %cst_12 = arith.constant 0.000000e+00 : f32
    %24 = vector.broadcast %cst_12 : f32 to vector<8x531xf32>
    %25 = arith.maximumf %23, %24 : vector<8x531xf32>
    %26 = vector.extract_strided_slice %25 {offsets = [0, 0], sizes = [8, 1], strides = [1, 1]} : vector<8x531xf32> to vector<8x1xf32>
    %27 = vector.extract_strided_slice %25 {offsets = [0, 180], sizes = [8, 256], strides = [1, 1]} : vector<8x531xf32> to vector<8x256xf32>
    %28 = vector.broadcast %26 : vector<8x1xf32> to vector<8x256xf32>
    %29 = arith.mulf %28, %27 : vector<8x256xf32>
    %30 = vector.extract_strided_slice %25 {offsets = [0, 1], sizes = [8, 1], strides = [1, 1]} : vector<8x531xf32> to vector<8x1xf32>
    %31 = vector.extract_strided_slice %25 {offsets = [0, 181], sizes = [8, 256], strides = [1, 1]} : vector<8x531xf32> to vector<8x256xf32>
    %32 = vector.broadcast %30 : vector<8x1xf32> to vector<8x256xf32>
    %33 = arith.mulf %32, %31 : vector<8x256xf32>
    %34 = arith.addf %29, %33 : vector<8x256xf32>
    %35 = vector.extract_strided_slice %25 {offsets = [0, 2], sizes = [8, 1], strides = [1, 1]} : vector<8x531xf32> to vector<8x1xf32>
    %36 = vector.extract_strided_slice %25 {offsets = [0, 182], sizes = [8, 256], strides = [1, 1]} : vector<8x531xf32> to vector<8x256xf32>
    %37 = vector.broadcast %35 : vector<8x1xf32> to vector<8x256xf32>
    %38 = arith.mulf %37, %36 : vector<8x256xf32>
    %39 = arith.addf %34, %38 : vector<8x256xf32>
    %40 = vector.extract_strided_slice %25 {offsets = [0, 3], sizes = [8, 1], strides = [1, 1]} : vector<8x531xf32> to vector<8x1xf32>
    %41 = vector.extract_strided_slice %25 {offsets = [0, 183], sizes = [8, 256], strides = [1, 1]} : vector<8x531xf32> to vector<8x256xf32>
    %42 = vector.broadcast %40 : vector<8x1xf32> to vector<8x256xf32>
    %43 = arith.mulf %42, %41 : vector<8x256xf32>
    %44 = arith.addf %39, %43 : vector<8x256xf32>
    %45 = vector.extract_strided_slice %25 {offsets = [0, 4], sizes = [8, 1], strides = [1, 1]} : vector<8x531xf32> to vector<8x1xf32>
    %46 = vector.extract_strided_slice %25 {offsets = [0, 184], sizes = [8, 256], strides = [1, 1]} : vector<8x531xf32> to vector<8x256xf32>
    %47 = vector.broadcast %45 : vector<8x1xf32> to vector<8x256xf32>
    %48 = arith.mulf %47, %46 : vector<8x256xf32>
    %49 = arith.addf %44, %48 : vector<8x256xf32>
    %50 = vector.extract_strided_slice %25 {offsets = [0, 5], sizes = [8, 1], strides = [1, 1]} : vector<8x531xf32> to vector<8x1xf32>
    %51 = vector.extract_strided_slice %25 {offsets = [0, 185], sizes = [8, 256], strides = [1, 1]} : vector<8x531xf32> to vector<8x256xf32>
    %52 = vector.broadcast %50 : vector<8x1xf32> to vector<8x256xf32>
    %53 = arith.mulf %52, %51 : vector<8x256xf32>
    %54 = arith.addf %49, %53 : vector<8x256xf32>
    %55 = vector.extract_strided_slice %25 {offsets = [0, 18], sizes = [8, 1], strides = [1, 1]} : vector<8x531xf32> to vector<8x1xf32>
    %56 = vector.extract_strided_slice %25 {offsets = [0, 198], sizes = [8, 256], strides = [1, 1]} : vector<8x531xf32> to vector<8x256xf32>
    %57 = vector.broadcast %55 : vector<8x1xf32> to vector<8x256xf32>
    %58 = arith.mulf %57, %56 : vector<8x256xf32>
    %59 = vector.extract_strided_slice %25 {offsets = [0, 19], sizes = [8, 1], strides = [1, 1]} : vector<8x531xf32> to vector<8x1xf32>
    %60 = vector.extract_strided_slice %25 {offsets = [0, 199], sizes = [8, 256], strides = [1, 1]} : vector<8x531xf32> to vector<8x256xf32>
    %61 = vector.broadcast %59 : vector<8x1xf32> to vector<8x256xf32>
    %62 = arith.mulf %61, %60 : vector<8x256xf32>
    %63 = arith.addf %58, %62 : vector<8x256xf32>
    %64 = vector.extract_strided_slice %25 {offsets = [0, 20], sizes = [8, 1], strides = [1, 1]} : vector<8x531xf32> to vector<8x1xf32>
    %65 = vector.extract_strided_slice %25 {offsets = [0, 200], sizes = [8, 256], strides = [1, 1]} : vector<8x531xf32> to vector<8x256xf32>
    %66 = vector.broadcast %64 : vector<8x1xf32> to vector<8x256xf32>
    %67 = arith.mulf %66, %65 : vector<8x256xf32>
    %68 = arith.addf %63, %67 : vector<8x256xf32>
    %69 = vector.extract_strided_slice %25 {offsets = [0, 21], sizes = [8, 1], strides = [1, 1]} : vector<8x531xf32> to vector<8x1xf32>
    %70 = vector.extract_strided_slice %25 {offsets = [0, 201], sizes = [8, 256], strides = [1, 1]} : vector<8x531xf32> to vector<8x256xf32>
    %71 = vector.broadcast %69 : vector<8x1xf32> to vector<8x256xf32>
    %72 = arith.mulf %71, %70 : vector<8x256xf32>
    %73 = arith.addf %68, %72 : vector<8x256xf32>
    %74 = vector.extract_strided_slice %25 {offsets = [0, 22], sizes = [8, 1], strides = [1, 1]} : vector<8x531xf32> to vector<8x1xf32>
    %75 = vector.extract_strided_slice %25 {offsets = [0, 202], sizes = [8, 256], strides = [1, 1]} : vector<8x531xf32> to vector<8x256xf32>
    %76 = vector.broadcast %74 : vector<8x1xf32> to vector<8x256xf32>
    %77 = arith.mulf %76, %75 : vector<8x256xf32>
    %78 = arith.addf %73, %77 : vector<8x256xf32>
    %79 = vector.extract_strided_slice %25 {offsets = [0, 23], sizes = [8, 1], strides = [1, 1]} : vector<8x531xf32> to vector<8x1xf32>
    %80 = vector.extract_strided_slice %25 {offsets = [0, 203], sizes = [8, 256], strides = [1, 1]} : vector<8x531xf32> to vector<8x256xf32>
    %81 = vector.broadcast %79 : vector<8x1xf32> to vector<8x256xf32>
    %82 = arith.mulf %81, %80 : vector<8x256xf32>
    %83 = arith.addf %78, %82 : vector<8x256xf32>
    %84 = vector.extract_strided_slice %25 {offsets = [0, 36], sizes = [8, 1], strides = [1, 1]} : vector<8x531xf32> to vector<8x1xf32>
    %85 = vector.extract_strided_slice %25 {offsets = [0, 216], sizes = [8, 256], strides = [1, 1]} : vector<8x531xf32> to vector<8x256xf32>
    %86 = vector.broadcast %84 : vector<8x1xf32> to vector<8x256xf32>
    %87 = arith.mulf %86, %85 : vector<8x256xf32>
    %88 = vector.extract_strided_slice %25 {offsets = [0, 37], sizes = [8, 1], strides = [1, 1]} : vector<8x531xf32> to vector<8x1xf32>
    %89 = vector.extract_strided_slice %25 {offsets = [0, 217], sizes = [8, 256], strides = [1, 1]} : vector<8x531xf32> to vector<8x256xf32>
    %90 = vector.broadcast %88 : vector<8x1xf32> to vector<8x256xf32>
    %91 = arith.mulf %90, %89 : vector<8x256xf32>
    %92 = arith.addf %87, %91 : vector<8x256xf32>
    %93 = vector.extract_strided_slice %25 {offsets = [0, 38], sizes = [8, 1], strides = [1, 1]} : vector<8x531xf32> to vector<8x1xf32>
    %94 = vector.extract_strided_slice %25 {offsets = [0, 218], sizes = [8, 256], strides = [1, 1]} : vector<8x531xf32> to vector<8x256xf32>
    %95 = vector.broadcast %93 : vector<8x1xf32> to vector<8x256xf32>
    %96 = arith.mulf %95, %94 : vector<8x256xf32>
    %97 = arith.addf %92, %96 : vector<8x256xf32>
    %98 = vector.extract_strided_slice %25 {offsets = [0, 39], sizes = [8, 1], strides = [1, 1]} : vector<8x531xf32> to vector<8x1xf32>
    %99 = vector.extract_strided_slice %25 {offsets = [0, 219], sizes = [8, 256], strides = [1, 1]} : vector<8x531xf32> to vector<8x256xf32>
    %100 = vector.broadcast %98 : vector<8x1xf32> to vector<8x256xf32>
    %101 = arith.mulf %100, %99 : vector<8x256xf32>
    %102 = arith.addf %97, %101 : vector<8x256xf32>
    %103 = vector.extract_strided_slice %25 {offsets = [0, 40], sizes = [8, 1], strides = [1, 1]} : vector<8x531xf32> to vector<8x1xf32>
    %104 = vector.extract_strided_slice %25 {offsets = [0, 220], sizes = [8, 256], strides = [1, 1]} : vector<8x531xf32> to vector<8x256xf32>
    %105 = vector.broadcast %103 : vector<8x1xf32> to vector<8x256xf32>
    %106 = arith.mulf %105, %104 : vector<8x256xf32>
    %107 = arith.addf %102, %106 : vector<8x256xf32>
    %108 = vector.extract_strided_slice %25 {offsets = [0, 41], sizes = [8, 1], strides = [1, 1]} : vector<8x531xf32> to vector<8x1xf32>
    %109 = vector.extract_strided_slice %25 {offsets = [0, 221], sizes = [8, 256], strides = [1, 1]} : vector<8x531xf32> to vector<8x256xf32>
    %110 = vector.broadcast %108 : vector<8x1xf32> to vector<8x256xf32>
    %111 = arith.mulf %110, %109 : vector<8x256xf32>
    %112 = arith.addf %107, %111 : vector<8x256xf32>
    %113 = vector.extract_strided_slice %25 {offsets = [0, 54], sizes = [8, 1], strides = [1, 1]} : vector<8x531xf32> to vector<8x1xf32>
    %114 = vector.extract_strided_slice %25 {offsets = [0, 234], sizes = [8, 256], strides = [1, 1]} : vector<8x531xf32> to vector<8x256xf32>
    %115 = vector.broadcast %113 : vector<8x1xf32> to vector<8x256xf32>
    %116 = arith.mulf %115, %114 : vector<8x256xf32>
    %117 = vector.extract_strided_slice %25 {offsets = [0, 55], sizes = [8, 1], strides = [1, 1]} : vector<8x531xf32> to vector<8x1xf32>
    %118 = vector.extract_strided_slice %25 {offsets = [0, 235], sizes = [8, 256], strides = [1, 1]} : vector<8x531xf32> to vector<8x256xf32>
    %119 = vector.broadcast %117 : vector<8x1xf32> to vector<8x256xf32>
    %120 = arith.mulf %119, %118 : vector<8x256xf32>
    %121 = arith.addf %116, %120 : vector<8x256xf32>
    %122 = vector.extract_strided_slice %25 {offsets = [0, 56], sizes = [8, 1], strides = [1, 1]} : vector<8x531xf32> to vector<8x1xf32>
    %123 = vector.extract_strided_slice %25 {offsets = [0, 236], sizes = [8, 256], strides = [1, 1]} : vector<8x531xf32> to vector<8x256xf32>
    %124 = vector.broadcast %122 : vector<8x1xf32> to vector<8x256xf32>
    %125 = arith.mulf %124, %123 : vector<8x256xf32>
    %126 = arith.addf %121, %125 : vector<8x256xf32>
    %127 = vector.extract_strided_slice %25 {offsets = [0, 57], sizes = [8, 1], strides = [1, 1]} : vector<8x531xf32> to vector<8x1xf32>
    %128 = vector.extract_strided_slice %25 {offsets = [0, 237], sizes = [8, 256], strides = [1, 1]} : vector<8x531xf32> to vector<8x256xf32>
    %129 = vector.broadcast %127 : vector<8x1xf32> to vector<8x256xf32>
    %130 = arith.mulf %129, %128 : vector<8x256xf32>
    %131 = arith.addf %126, %130 : vector<8x256xf32>
    %132 = vector.extract_strided_slice %25 {offsets = [0, 58], sizes = [8, 1], strides = [1, 1]} : vector<8x531xf32> to vector<8x1xf32>
    %133 = vector.extract_strided_slice %25 {offsets = [0, 238], sizes = [8, 256], strides = [1, 1]} : vector<8x531xf32> to vector<8x256xf32>
    %134 = vector.broadcast %132 : vector<8x1xf32> to vector<8x256xf32>
    %135 = arith.mulf %134, %133 : vector<8x256xf32>
    %136 = arith.addf %131, %135 : vector<8x256xf32>
    %137 = vector.extract_strided_slice %25 {offsets = [0, 59], sizes = [8, 1], strides = [1, 1]} : vector<8x531xf32> to vector<8x1xf32>
    %138 = vector.extract_strided_slice %25 {offsets = [0, 239], sizes = [8, 256], strides = [1, 1]} : vector<8x531xf32> to vector<8x256xf32>
    %139 = vector.broadcast %137 : vector<8x1xf32> to vector<8x256xf32>
    %140 = arith.mulf %139, %138 : vector<8x256xf32>
    %141 = arith.addf %136, %140 : vector<8x256xf32>
    %142 = vector.extract_strided_slice %25 {offsets = [0, 72], sizes = [8, 1], strides = [1, 1]} : vector<8x531xf32> to vector<8x1xf32>
    %143 = vector.extract_strided_slice %25 {offsets = [0, 252], sizes = [8, 256], strides = [1, 1]} : vector<8x531xf32> to vector<8x256xf32>
    %144 = vector.broadcast %142 : vector<8x1xf32> to vector<8x256xf32>
    %145 = arith.mulf %144, %143 : vector<8x256xf32>
    %146 = vector.extract_strided_slice %25 {offsets = [0, 73], sizes = [8, 1], strides = [1, 1]} : vector<8x531xf32> to vector<8x1xf32>
    %147 = vector.extract_strided_slice %25 {offsets = [0, 253], sizes = [8, 256], strides = [1, 1]} : vector<8x531xf32> to vector<8x256xf32>
    %148 = vector.broadcast %146 : vector<8x1xf32> to vector<8x256xf32>
    %149 = arith.mulf %148, %147 : vector<8x256xf32>
    %150 = arith.addf %145, %149 : vector<8x256xf32>
    %151 = vector.extract_strided_slice %25 {offsets = [0, 74], sizes = [8, 1], strides = [1, 1]} : vector<8x531xf32> to vector<8x1xf32>
    %152 = vector.extract_strided_slice %25 {offsets = [0, 254], sizes = [8, 256], strides = [1, 1]} : vector<8x531xf32> to vector<8x256xf32>
    %153 = vector.broadcast %151 : vector<8x1xf32> to vector<8x256xf32>
    %154 = arith.mulf %153, %152 : vector<8x256xf32>
    %155 = arith.addf %150, %154 : vector<8x256xf32>
    %156 = vector.extract_strided_slice %25 {offsets = [0, 75], sizes = [8, 1], strides = [1, 1]} : vector<8x531xf32> to vector<8x1xf32>
    %157 = vector.extract_strided_slice %25 {offsets = [0, 255], sizes = [8, 256], strides = [1, 1]} : vector<8x531xf32> to vector<8x256xf32>
    %158 = vector.broadcast %156 : vector<8x1xf32> to vector<8x256xf32>
    %159 = arith.mulf %158, %157 : vector<8x256xf32>
    %160 = arith.addf %155, %159 : vector<8x256xf32>
    %161 = vector.extract_strided_slice %25 {offsets = [0, 76], sizes = [8, 1], strides = [1, 1]} : vector<8x531xf32> to vector<8x1xf32>
    %162 = vector.extract_strided_slice %25 {offsets = [0, 256], sizes = [8, 256], strides = [1, 1]} : vector<8x531xf32> to vector<8x256xf32>
    %163 = vector.broadcast %161 : vector<8x1xf32> to vector<8x256xf32>
    %164 = arith.mulf %163, %162 : vector<8x256xf32>
    %165 = arith.addf %160, %164 : vector<8x256xf32>
    %166 = vector.extract_strided_slice %25 {offsets = [0, 77], sizes = [8, 1], strides = [1, 1]} : vector<8x531xf32> to vector<8x1xf32>
    %167 = vector.extract_strided_slice %25 {offsets = [0, 257], sizes = [8, 256], strides = [1, 1]} : vector<8x531xf32> to vector<8x256xf32>
    %168 = vector.broadcast %166 : vector<8x1xf32> to vector<8x256xf32>
    %169 = arith.mulf %168, %167 : vector<8x256xf32>
    %170 = arith.addf %165, %169 : vector<8x256xf32>
    %171 = vector.extract_strided_slice %25 {offsets = [0, 90], sizes = [8, 1], strides = [1, 1]} : vector<8x531xf32> to vector<8x1xf32>
    %172 = vector.extract_strided_slice %25 {offsets = [0, 270], sizes = [8, 256], strides = [1, 1]} : vector<8x531xf32> to vector<8x256xf32>
    %173 = vector.broadcast %171 : vector<8x1xf32> to vector<8x256xf32>
    %174 = arith.mulf %173, %172 : vector<8x256xf32>
    %175 = vector.extract_strided_slice %25 {offsets = [0, 91], sizes = [8, 1], strides = [1, 1]} : vector<8x531xf32> to vector<8x1xf32>
    %176 = vector.extract_strided_slice %25 {offsets = [0, 271], sizes = [8, 256], strides = [1, 1]} : vector<8x531xf32> to vector<8x256xf32>
    %177 = vector.broadcast %175 : vector<8x1xf32> to vector<8x256xf32>
    %178 = arith.mulf %177, %176 : vector<8x256xf32>
    %179 = arith.addf %174, %178 : vector<8x256xf32>
    %180 = vector.extract_strided_slice %25 {offsets = [0, 92], sizes = [8, 1], strides = [1, 1]} : vector<8x531xf32> to vector<8x1xf32>
    %181 = vector.extract_strided_slice %25 {offsets = [0, 272], sizes = [8, 256], strides = [1, 1]} : vector<8x531xf32> to vector<8x256xf32>
    %182 = vector.broadcast %180 : vector<8x1xf32> to vector<8x256xf32>
    %183 = arith.mulf %182, %181 : vector<8x256xf32>
    %184 = arith.addf %179, %183 : vector<8x256xf32>
    %185 = vector.extract_strided_slice %25 {offsets = [0, 93], sizes = [8, 1], strides = [1, 1]} : vector<8x531xf32> to vector<8x1xf32>
    %186 = vector.extract_strided_slice %25 {offsets = [0, 273], sizes = [8, 256], strides = [1, 1]} : vector<8x531xf32> to vector<8x256xf32>
    %187 = vector.broadcast %185 : vector<8x1xf32> to vector<8x256xf32>
    %188 = arith.mulf %187, %186 : vector<8x256xf32>
    %189 = arith.addf %184, %188 : vector<8x256xf32>
    %190 = vector.extract_strided_slice %25 {offsets = [0, 94], sizes = [8, 1], strides = [1, 1]} : vector<8x531xf32> to vector<8x1xf32>
    %191 = vector.extract_strided_slice %25 {offsets = [0, 274], sizes = [8, 256], strides = [1, 1]} : vector<8x531xf32> to vector<8x256xf32>
    %192 = vector.broadcast %190 : vector<8x1xf32> to vector<8x256xf32>
    %193 = arith.mulf %192, %191 : vector<8x256xf32>
    %194 = arith.addf %189, %193 : vector<8x256xf32>
    %195 = vector.extract_strided_slice %25 {offsets = [0, 95], sizes = [8, 1], strides = [1, 1]} : vector<8x531xf32> to vector<8x1xf32>
    %196 = vector.extract_strided_slice %25 {offsets = [0, 275], sizes = [8, 256], strides = [1, 1]} : vector<8x531xf32> to vector<8x256xf32>
    %197 = vector.broadcast %195 : vector<8x1xf32> to vector<8x256xf32>
    %198 = arith.mulf %197, %196 : vector<8x256xf32>
    %199 = arith.addf %194, %198 : vector<8x256xf32>
    %200 = arith.addf %54, %83 : vector<8x256xf32>
    %201 = arith.addf %112, %141 : vector<8x256xf32>
    %202 = arith.addf %170, %199 : vector<8x256xf32>
    %203 = arith.addf %200, %201 : vector<8x256xf32>
    %204 = arith.addf %203, %202 : vector<8x256xf32>
    %c0_13 = arith.constant 0 : index
    %c0_14 = arith.constant 0 : index
    %c0_15 = arith.constant 0 : index
    %205 = vector.load %arg6[%c0_13, %c0_14, %c0_15] : memref<1x8x256xf32, #tpu.memory_space<vmem>>, vector<1x8x256xf32>
    %206 = vector.shape_cast %205 : vector<1x8x256xf32> to vector<8x256xf32>
    %207 = vector.shape_cast %204 : vector<8x256xf32> to vector<1x8x256xf32>
    tpu.vector_store %arg6[%c0_13, %c0_14, %c0_15], %207 {strides = array<i32>} : memref<1x8x256xf32, #tpu.memory_space<vmem>>, vector<1x8x256xf32>,
    return
  }
  func.func @transform_0(%arg0: i32) -> (i32, i32, i32) {
    %c0_i32 = arith.constant 0 : i32
    %c0_i32_0 = arith.constant 0 : i32
    %c0_i32_1 = arith.constant 0 : i32
    return %arg0, %c0_i32, %c0_i32_0 : i32, i32, i32
  }
  func.func @transform_1(%arg0: i32) -> (i32, i32) {
    %c0_i32 = arith.constant 0 : i32
    %c0_i32_0 = arith.constant 0 : i32
    %c0_i32_1 = arith.constant 0 : i32
    return %c0_i32, %c0_i32_0 : i32, i32
  }
  func.func @transform_2(%arg0: i32) -> (i32, i32) {
    %c0_i32 = arith.constant 0 : i32
    %c0_i32_0 = arith.constant 0 : i32
    %c0_i32_1 = arith.constant 0 : i32
    return %c0_i32, %c0_i32_0 : i32, i32
  }
  func.func @transform_3(%arg0: i32) -> (i32, i32) {
    %c0_i32 = arith.constant 0 : i32
    %c0_i32_0 = arith.constant 0 : i32
    %c0_i32_1 = arith.constant 0 : i32
    return %c0_i32, %c0_i32_0 : i32, i32
  }
  func.func @transform_4(%arg0: i32) -> (i32, i32) {
    %c0_i32 = arith.constant 0 : i32
    %c0_i32_0 = arith.constant 0 : i32
    %c0_i32_1 = arith.constant 0 : i32
    return %c0_i32, %c0_i32_0 : i32, i32
  }
  func.func @transform_5(%arg0: i32) -> (i32, i32, i32) {
    %c0_i32 = arith.constant 0 : i32
    %c0_i32_0 = arith.constant 0 : i32
    %c0_i32_1 = arith.constant 0 : i32
    return %arg0, %c0_i32, %c0_i32_0 : i32, i32, i32
  }
}

</mosaic_0001>

<llo_original>
// kernel: siamese_forward.1
$region0: #{siamese_forward.1}
  #allocation0 [shape = 'u32[]', space=smem, size = 0x4, offset = 0x4, fixed_abs, tag = 'smem constant byte address 0x4 - core index']
  #allocation1 [shape = 'u32[144,128]{1,0:T(1,128)}', space=vmem, size = 0x12000, scoped, tag = 'internal scratch']
  %s0 = inlined_call_operand.vmem [shape: f32[2,36,569], index: 0, kind: input, shape index: {}]
  %s1 = inlined_call_operand.vmem [shape: f32[8,36], index: 1, kind: input, shape index: {}]
  %s2 = inlined_call_operand.vmem [shape: f32[8,1], index: 2, kind: input, shape index: {}]
  %s3 = inlined_call_operand.vmem [shape: f32[8,72], index: 3, kind: input, shape index: {}]
  %s4 = inlined_call_operand.vmem [shape: f32[8,1], index: 4, kind: input, shape index: {}]
  %s5 = inlined_call_operand.vmem [shape: f32[2,8,256], index: 5, kind: output, shape index: {}]
  %s6 = sld [smem:[#allocation0]]
  $region53: #{siamese_forward.1} parent=0
    _
  %s8 = ssub.s32 1, %s6
  %s9 = scalar_select 0, %s8, %s6
  loop: start=0, step=1, limit=4
  $region2: #{siamese_forward.1} parent=0 // loop_pre_header
    _
  $region3: #{siamese_forward.1} parent=0 // loop_header
    %s11 = sphi 0, %s15
    %p12 = scmp.ge.s32.totalorder %s11, 4
    %s21 = sphi 0, %s23
    %s24 = sphi 0, %s21
    %s25 = sphi 0, %s24
    %s41 = sphi 0, %s25
    %s45 = sphi 0, %s45
    %s47 = sphi 0, %s45
    %s48 = sphi 0, %s47
    %s62 = sphi 0, %s48
    %s66 = sphi 0, %s66
    %s68 = sphi 0, %s66
    %s69 = sphi 0, %s68
    %s83 = sphi 0, %s69
    %s87 = sphi 0, %s87
    %s89 = sphi 0, %s87
    %s90 = sphi 0, %s89
    %s104 = sphi 0, %s90
    %s108 = sphi 0, %s108
    %s110 = sphi 0, %s108
    %s111 = sphi 0, %s110
    %s125 = sphi 0, %s111
    %s131 = sphi 0, %s133
    %s134 = sphi 0, %s131
    %s135 = sphi 0, %s134
    %s151 = sphi 0, %s135
  $region4: #{siamese_forward.1} parent=0 // loop_header_branch
    %14 = sbr.rel (%p12) target = $region8
  $region5: #{siamese_forward.1} parent=0 // loop_body
    %s16 = ssub.s32 %s11, 1
    %s17 = ssub.s32 %s11, 2
    %s18 = sadd.s32 %s11, 1
    %s19 = ssub.s32 %s11, %s18
    %p20 = scmp.eq.s32.totalorder %s19, 0
    %s22 = sadd.s32 %s21, 1
    %s23 = scalar_select %p20, %s21, %s22
    %p26 = pneg %p20
    %p27 = scmp.eq.s32.totalorder %s11, 1
    %p28 = por %p26, %p27
    %p29 = scmp.ne.s32.totalorder %s21, %s24
    %p30 = scmp.eq.s32.totalorder %s11, 0
    %p31 = por %p29, %p30
    %p32 = scmp.ne.s32.totalorder %s21, %s24
    %p33 = scmp.eq.s32.totalorder %s16, 1
    %p34 = por %p32, %p33
    %p35 = scmp.ne.s32.totalorder %s24, %s25
    %p36 = scmp.eq.s32.totalorder %s16, 0
    %p37 = por %p35, %p36
    %p38 = scmp.ne.s32.totalorder %s24, %s25
    %p39 = scmp.eq.s32.totalorder %s17, 1
    %p40 = por %p38, %p39
    %p42 = scmp.ne.s32.totalorder %s25, %s41
    %p43 = scmp.eq.s32.totalorder %s17, 0
    %p44 = por %p42, %p43
    %s46 = sadd.s32 %s45, 1
    %p49 = scmp.eq.s32.totalorder %s11, 1
    %p50 = scmp.ne.s32.totalorder %s45, %s47
    %p51 = scmp.eq.s32.totalorder %s11, 0
    %p52 = por %p50, %p51
    %p53 = scmp.ne.s32.totalorder %s45, %s47
    %p54 = scmp.eq.s32.totalorder %s16, 1
    %p55 = por %p53, %p54
    %p56 = scmp.ne.s32.totalorder %s47, %s48
    %p57 = scmp.eq.s32.totalorder %s16, 0
    %p58 = por %p56, %p57
    %p59 = scmp.ne.s32.totalorder %s47, %s48
    %p60 = scmp.eq.s32.totalorder %s17, 1
    %p61 = por %p59, %p60
    %p63 = scmp.ne.s32.totalorder %s48, %s62
    %p64 = scmp.eq.s32.totalorder %s17, 0
    %p65 = por %p63, %p64
    %s67 = sadd.s32 %s66, 1
    %p70 = scmp.eq.s32.totalorder %s11, 1
    %p71 = scmp.ne.s32.totalorder %s66, %s68
    %p72 = scmp.eq.s32.totalorder %s11, 0
    %p73 = por %p71, %p72
    %p74 = scmp.ne.s32.totalorder %s66, %s68
    %p75 = scmp.eq.s32.totalorder %s16, 1
    %p76 = por %p74, %p75
    %p77 = scmp.ne.s32.totalorder %s68, %s69
    %p78 = scmp.eq.s32.totalorder %s16, 0
    %p79 = por %p77, %p78
    %p80 = scmp.ne.s32.totalorder %s68, %s69
    %p81 = scmp.eq.s32.totalorder %s17, 1
    %p82 = por %p80, %p81
    %p84 = scmp.ne.s32.totalorder %s69, %s83
    %p85 = scmp.eq.s32.totalorder %s17, 0
    %p86 = por %p84, %p85
    %s88 = sadd.s32 %s87, 1
    %p91 = scmp.eq.s32.totalorder %s11, 1
    %p92 = scmp.ne.s32.totalorder %s87, %s89
    %p93 = scmp.eq.s32.totalorder %s11, 0
    %p94 = por %p92, %p93
    %p95 = scmp.ne.s32.totalorder %s87, %s89
    %p96 = scmp.eq.s32.totalorder %s16, 1
    %p97 = por %p95, %p96
    %p98 = scmp.ne.s32.totalorder %s89, %s90
    %p99 = scmp.eq.s32.totalorder %s16, 0
    %p100 = por %p98, %p99
    %p101 = scmp.ne.s32.totalorder %s89, %s90
    %p102 = scmp.eq.s32.totalorder %s17, 1
    %p103 = por %p101, %p102
    %p105 = scmp.ne.s32.totalorder %s90, %s104
    %p106 = scmp.eq.s32.totalorder %s17, 0
    %p107 = por %p105, %p106
    %s109 = sadd.s32 %s108, 1
    %p112 = scmp.eq.s32.totalorder %s11, 1
    %p113 = scmp.ne.s32.totalorder %s108, %s110
    %p114 = scmp.eq.s32.totalorder %s11, 0
    %p115 = por %p113, %p114
    %p116 = scmp.ne.s32.totalorder %s108, %s110
    %p117 = scmp.eq.s32.totalorder %s16, 1
    %p118 = por %p116, %p117
    %p119 = scmp.ne.s32.totalorder %s110, %s111
    %p120 = scmp.eq.s32.totalorder %s16, 0
    %p121 = por %p119, %p120
    %p122 = scmp.ne.s32.totalorder %s110, %s111
    %p123 = scmp.eq.s32.totalorder %s17, 1
    %p124 = por %p122, %p123
    %p126 = scmp.ne.s32.totalorder %s111, %s125
    %p127 = scmp.eq.s32.totalorder %s17, 0
    %p128 = por %p126, %p127
    %s129 = ssub.s32 %s11, %s18
    %p130 = scmp.eq.s32.totalorder %s129, 0
    %s132 = sadd.s32 %s131, 1
    %s133 = scalar_select %p130, %s131, %s132
    %p136 = pneg %p130
    %p137 = scmp.eq.s32.totalorder %s11, 1
    %p138 = por %p136, %p137
    %p139 = scmp.ne.s32.totalorder %s131, %s134
    %p140 = scmp.eq.s32.totalorder %s11, 0
    %p141 = por %p139, %p140
    %p142 = scmp.ne.s32.totalorder %s131, %s134
    %p143 = scmp.eq.s32.totalorder %s16, 1
    %p144 = por %p142, %p143
    %p145 = scmp.ne.s32.totalorder %s134, %s135
    %p146 = scmp.eq.s32.totalorder %s16, 0
    %p147 = por %p145, %p146
    %p148 = scmp.ne.s32.totalorder %s134, %s135
    %p149 = scmp.eq.s32.totalorder %s17, 1
    %p150 = por %p148, %p149
    %p152 = scmp.ne.s32.totalorder %s135, %s151
    %p153 = scmp.eq.s32.totalorder %s17, 0
    %p154 = por %p152, %p153
    %p155 = scmp.le.s32.totalorder 1, %s11
    %p156 = scmp.lt.s32.totalorder %s11, 3
    %p157 = pnand %p155, %p156
    %p158 = pneg %p157
    // Predicated region
    $region9: #{siamese_forward.1} parent=5 // pred_check
      _
    $region10: #{siamese_forward.1} parent=5 // pred_check_branch
      %160 = sbr.rel (%p157) target = $region12
    $region11: #{siamese_forward.1} parent=5 // pred_region
      %s161 = ssub.s32 %s11, 1
      // Predicated region
      $region13: #{siamese_forward.1} parent=11 // pred_check
        %p162 = pneg %p58
      $region14: #{siamese_forward.1} parent=11 // pred_check_branch
        %164 = sbr.rel (%p162) target = $region16
      $region15: #{siamese_forward.1} parent=11 // pred_region
        _
      $region16: #{siamese_forward.1} parent=11 // pred_fallthru
        _
      // Predicated region
      $region17: #{siamese_forward.1} parent=11 // pred_check
        %p165 = pneg %p79
      $region18: #{siamese_forward.1} parent=11 // pred_check_branch
        %167 = sbr.rel (%p165) target = $region20
      $region19: #{siamese_forward.1} parent=11 // pred_region
        _
      $region20: #{siamese_forward.1} parent=11 // pred_fallthru
        _
      // Predicated region
      $region21: #{siamese_forward.1} parent=11 // pred_check
        %p168 = pneg %p100
      $region22: #{siamese_forward.1} parent=11 // pred_check_branch
        %170 = sbr.rel (%p168) target = $region24
      $region23: #{siamese_forward.1} parent=11 // pred_region
        _
      $region24: #{siamese_forward.1} parent=11 // pred_fallthru
        _
      // Predicated region
      $region25: #{siamese_forward.1} parent=11 // pred_check
        %p171 = pneg %p121
      $region26: #{siamese_forward.1} parent=11 // pred_check_branch
        %173 = sbr.rel (%p171) target = $region28
      $region27: #{siamese_forward.1} parent=11 // pred_region
        _
      $region28: #{siamese_forward.1} parent=11 // pred_fallthru
        _
    $region12: #{siamese_forward.1} parent=5 // pred_fallthru
      _
    %p174 = scmp.lt.s32.totalorder %s11, 2
    // Predicated region
    $region29: #{siamese_forward.1} parent=5 // pred_check
      %p175 = pneg %p174
    $region30: #{siamese_forward.1} parent=5 // pred_check_branch
      %177 = sbr.rel (%p175) target = $region32
    $region31: #{siamese_forward.1} parent=5 // pred_region
      // Predicated region
      $region33: #{siamese_forward.1} parent=31 // pred_check
        %p178 = pneg %p31
      $region34: #{siamese_forward.1} parent=31 // pred_check_branch
        %180 = sbr.rel (%p178) target = $region36
      $region35: #{siamese_forward.1} parent=31 // pred_region
        %p181 = scmp.lt.s32.totalorder %s11, 1
        %s182 = scalar_select %p181, %s11, 1
        %s183 = smul.addr %s182, 25
        %s184 = smul.addr %s183, 8
        %s185 = scalar_lea.vmem %s0, %s184
      $region36: #{siamese_forward.1} parent=31 // pred_fallthru
        _
    $region32: #{siamese_forward.1} parent=5 // pred_fallthru
      _
    %p186 = scmp.le.s32.totalorder 1, %s11
    %p187 = scmp.lt.s32.totalorder %s11, 3
    %p188 = pnand %p186, %p187
    %p189 = pneg %p188
    // Predicated region
    $region37: #{siamese_forward.1} parent=5 // pred_check
      _
    $region38: #{siamese_forward.1} parent=5 // pred_check_branch
      %191 = sbr.rel (%p188) target = $region40
    $region39: #{siamese_forward.1} parent=5 // pred_region
      %s192 = ssub.s32 %s11, 1
      %p193 = scmp.lt.s32.totalorder %s16, 1
      %s194 = scalar_select %p193, %s16, 1
      %s195 = smul.addr %s194, 25
      %s196 = smul.addr %s195, 8
      %s197 = scalar_lea.vmem %s0, %s196
      %p198 = pneg %p37
      %p199 = pneg %p34
      %p200 = pneg %p58
      %p201 = pneg %p55
      %p202 = pneg %p79
      %p203 = pneg %p76
      %p204 = pneg %p100
      %p205 = pneg %p97
      %p206 = pneg %p121
      %p207 = pneg %p118
      %p208 = pneg %p147
      %p209 = pneg %p144
      %p210 = scmp.lt.s32.totalorder %s16, 1
      %s211 = scalar_select %p210, %s16, 1
      %s212 = smul.addr %s211, 2
      %s213 = smul.addr %s212, 8
      %s214 = scalar_lea.vmem %s5, %s213
      %p215 = scmp.lt.s32.totalorder %s16, 1
      %s216 = scalar_select %p215, %s16, 1
      %s217 = smul.addr %s216, 25
      %s218 = smul.addr %s217, 8
      %s219 = scalar_lea.vmem %s0, %s218
      %p220 = scmp.lt.s32.totalorder %s16, 1
      %s221 = scalar_select %p220, %s16, 1
      %s222 = smul.addr %s221, 2
      %s223 = smul.addr %s222, 8
      %s224 = scalar_lea.vmem %s5, %s223
      %v225 = vld [vmem:[%s1] sm:$0xff]
      %v226 = vld [vmem:[%s219] sm:$0xff]
      %v227 = vld [vmem:[%s219 + $0x8] sm:$0xff]
      %v228 = vld [vmem:[%s219 + $0x10] sm:$0xff]
      %v229 = vld [vmem:[%s219 + $0x18] sm:$0xff]
      %v230 = vld [vmem:[%s219 + $0x20] sm:$0xff]
      %v231 = vld [vmem:[%s219 + $0x28] sm:$0xff]
      %v232 = vld [vmem:[%s219 + $0x30] sm:$0xff]
      %v233 = vld [vmem:[%s219 + $0x38] sm:$0xff]
      %v234 = vld [vmem:[%s219 + $0x40] sm:$0xff]
      %v235 = vld [vmem:[%s219 + $0x48] sm:$0xff]
      %v236 = vld [vmem:[%s219 + $0x50] sm:$0xff]
      %v237 = vld [vmem:[%s219 + $0x58] sm:$0xff]
      %v238 = vld [vmem:[%s219 + $0x60] sm:$0xff]
      %v239 = vld [vmem:[%s219 + $0x68] sm:$0xff]
      %v240 = vld [vmem:[%s219 + $0x70] sm:$0xff]
      %v241 = vld [vmem:[%s219 + $0x78] sm:$0xff]
      %v242 = vld [vmem:[%s219 + $0x80] sm:$0xff]
      %v243 = vld [vmem:[%s219 + $0x88] sm:$0xff]
      %v244 = vld [vmem:[%s219 + $0x90] sm:$0xff]
      %v245 = vld [vmem:[%s219 + $0x98] sm:$0xff]
      %v246 = vld [vmem:[%s219 + $0xa0] sm:$0xf]
      %v247 = vld [vmem:[%s219 + $0xa8] sm:$0xf]
      %v248 = vld [vmem:[%s219 + $0xb0] sm:$0xf]
      %v249 = vld [vmem:[%s219 + $0xb8] sm:$0xf]
      %v250 = vld [vmem:[%s219 + $0xc0] sm:$0xf]
      %v251 = vld [vmem:[%s2] sm:$0xff]
      %253 = vset.pattern.permute.xlu0 0
      %254 = vperm.xlu0 %253, %v251
      %v255 = vpop.permute.xlu0 %254
      %vm257 = vcmask 293888
      %v259 = vsel %vm257, %v225, 0
      %vm261 = vcmask 1043456
      %v263 = vsel %vm261, %v246, 0
      %v266 = vsel %vm261, %v247, 0
      %v269 = vsel %vm261, %v248, 0
      %v272 = vsel %vm261, %v249, 0
      %v275 = vsel %vm261, %v250, 0
      %277 = vmatprep.subr.mxu0 %v227
      %278 = vmatpush1.msra.mxu0 %v226
      %279 = vmatprep.subr.mxu0 %v232
      %280 = vmatpush1.msra.mxu0 %v231
      %281 = vmatprep.subr.mxu0 %v237
      %282 = vmatpush1.msra.mxu0 %v236
      %283 = vmatprep.subr.mxu0 %v242
      %284 = vmatpush1.msra.mxu0 %v241
      %285 = vmatprep.subr.mxu0 %v266
      %286 = vmatpush1.msra.mxu0 %v263
      %287 = vmatprep.subr.mxu0 0.0
      %288 = vmatpush1.msra.mxu0 0.0
      %289 = vmatprep.subr.mxu0 0.0
      %290 = vmatpush1.msra.mxu0 0.0
      %291 = vmatprep.subr.mxu0 0.0
      %292 = vmatpush1.msra.mxu0 0.0
      %293 = vmatprep.subr.mxu0 0.0
      %294 = vmatpush1.msra.mxu0 0.0
      %295 = vmatprep.subr.mxu0 0.0
      %296 = vmatpush1.msra.mxu0 0.0
      %297 = vmatprep.subr.mxu0 0.0
      %298 = vmatpush1.msra.mxu0 0.0
      %299 = vmatprep.subr.mxu0 0.0
      %300 = vmatpush1.msra.mxu0 0.0
      %301 = vmatprep.subr.mxu0 0.0
      %302 = vmatpush1.msra.mxu0 0.0
      %303 = vmatprep.subr.mxu0 0.0
      %304 = vmatpush1.msra.mxu0 0.0
      %305 = vmatprep.subr.mxu0 0.0
      %306 = vmatpush1.msra.mxu0 0.0
      %307 = vmatprep.subr.mxu0 0.0
      %308 = vmatpush1.msra.mxu0 0.0
      %309 = vmatprep.subr.mxu0 0.0
      %310 = vmatpush1.msra.mxu0 0.0
      %311 = vmatprep.subr.mxu0 0.0
      %312 = vmatpush1.msra.mxu0 0.0
      %313 = vmatprep.subr.mxu0 0.0
      %314 = vmatpush1.msra.mxu0 0.0
      %315 = vmatprep.subr.mxu0 0.0
      %316 = vmatpush1.msra.mxu0 0.0
      %317 = vmatprep.subr.mxu0 0.0
      %318 = vmatpush1.msra.mxu0 0.0
      %319 = vmatprep.subr.mxu0 0.0
      %320 = vmatpush1.msra.mxu0 0.0
      %321 = vmatprep.subr.mxu0 0.0
      %322 = vmatpush1.msra.mxu0 0.0
      %323 = vmatprep.subr.mxu0 0.0
      %324 = vmatpush1.msra.mxu0 0.0
      %325 = vmatprep.subr.mxu0 0.0
      %326 = vmatpush1.msra.mxu0 0.0
      %327 = vmatprep.subr.mxu0 0.0
      %328 = vmatpush1.msra.mxu0 0.0
      %329 = vmatprep.subr.mxu0 0.0
      %330 = vmatpush1.msra.mxu0 0.0
      %331 = vmatprep.subr.mxu0 0.0
      %332 = vmatpush1.msra.mxu0 0.0
      %333 = vmatprep.subr.mxu0 0.0
      %334 = vmatpush1.msra.mxu0 0.0
      %335 = vmatprep.subr.mxu0 0.0
      %336 = vmatpush1.msra.mxu0 0.0
      %337 = vmatprep.subr.mxu0 0.0
      %338 = vmatpush1.msra.mxu0 0.0
      %339 = vmatprep.subr.mxu0 0.0
      %340 = vmatpush1.msra.mxu0 0.0
      %341 = vmatprep.mubr.f32.mxu0 0.0
      %342 = vmatmul.mubr.f32.gmra.mrb[0].mxu0 %v259
      %v343 = vpop.f32.mrb[0].mxu0
      %v344 = vadd.f32 %v255, %v343
      %v345 = vpop.f32.mrb[0].mxu0
      %v346 = vadd.f32 %v255, %v345
      %347 = vdwg.mxu0
      %348 = vmatprep.subr.mxu0 %v229
      %349 = vmatpush1.msra.mxu0 %v228
      %350 = vmatprep.subr.mxu0 %v234
      %351 = vmatpush1.msra.mxu0 %v233
      %352 = vmatprep.subr.mxu0 %v239
      %353 = vmatpush1.msra.mxu0 %v238
      %354 = vmatprep.subr.mxu0 %v244
      %355 = vmatpush1.msra.mxu0 %v243
      %356 = vmatprep.subr.mxu0 %v272
      %357 = vmatpush1.msra.mxu0 %v269
      %358 = vmatprep.subr.mxu0 0.0
      %359 = vmatpush1.msra.mxu0 0.0
      %360 = vmatprep.subr.mxu0 0.0
      %361 = vmatpush1.msra.mxu0 0.0
      %362 = vmatprep.subr.mxu0 0.0
      %363 = vmatpush1.msra.mxu0 0.0
      %364 = vmatprep.subr.mxu0 0.0
      %365 = vmatpush1.msra.mxu0 0.0
      %366 = vmatprep.subr.mxu0 0.0
      %367 = vmatpush1.msra.mxu0 0.0
      %368 = vmatprep.subr.mxu0 0.0
      %369 = vmatpush1.msra.mxu0 0.0
      %370 = vmatprep.subr.mxu0 0.0
      %371 = vmatpush1.msra.mxu0 0.0
      %372 = vmatprep.subr.mxu0 0.0
      %373 = vmatpush1.msra.mxu0 0.0
      %374 = vmatprep.subr.mxu0 0.0
      %375 = vmatpush1.msra.mxu0 0.0
      %376 = vmatprep.subr.mxu0 0.0
      %377 = vmatpush1.msra.mxu0 0.0
      %378 = vmatprep.subr.mxu0 0.0
      %379 = vmatpush1.msra.mxu0 0.0
      %380 = vmatprep.subr.mxu0 0.0
      %381 = vmatpush1.msra.mxu0 0.0
      %382 = vmatprep.subr.mxu0 0.0
      %383 = vmatpush1.msra.mxu0 0.0
      %384 = vmatprep.subr.mxu0 0.0
      %385 = vmatpush1.msra.mxu0 0.0
      %386 = vmatprep.subr.mxu0 0.0
      %387 = vmatpush1.msra.mxu0 0.0
      %388 = vmatprep.subr.mxu0 0.0
      %389 = vmatpush1.msra.mxu0 0.0
      %390 = vmatprep.subr.mxu0 0.0
      %391 = vmatpush1.msra.mxu0 0.0
      %392 = vmatprep.subr.mxu0 0.0
      %393 = vmatpush1.msra.mxu0 0.0
      %394 = vmatprep.subr.mxu0 0.0
      %395 = vmatpush1.msra.mxu0 0.0
      %396 = vmatprep.subr.mxu0 0.0
      %397 = vmatpush1.msra.mxu0 0.0
      %398 = vmatprep.subr.mxu0 0.0
      %399 = vmatpush1.msra.mxu0 0.0
      %400 = vmatprep.subr.mxu0 0.0
      %401 = vmatpush1.msra.mxu0 0.0
      %402 = vmatprep.subr.mxu0 0.0
      %403 = vmatpush1.msra.mxu0 0.0
      %404 = vmatprep.subr.mxu0 0.0
      %405 = vmatpush1.msra.mxu0 0.0
      %406 = vmatprep.subr.mxu0 0.0
      %407 = vmatpush1.msra.mxu0 0.0
      %408 = vmatprep.subr.mxu0 0.0
      %409 = vmatpush1.msra.mxu0 0.0
      %410 = vmatprep.subr.mxu0 0.0
      %411 = vmatpush1.msra.mxu0 0.0
      %412 = vmatprep.mubr.f32.mxu0 0.0
      %413 = vmatmul.mubr.f32.gmra.mrb[0].mxu0 %v259
      %v414 = vpop.f32.mrb[0].mxu0
      %v415 = vadd.f32 %v255, %v414
      %v416 = vpop.f32.mrb[0].mxu0
      %v417 = vadd.f32 %v255, %v416
      %418 = vdwg.mxu0
      %419 = vmatprep.subr.mxu0 0.0
      %420 = vmatpush1.msra.mxu0 %v230
      %421 = vmatprep.subr.mxu0 0.0
      %422 = vmatpush1.msra.mxu0 %v235
      %423 = vmatprep.subr.mxu0 0.0
      %424 = vmatpush1.msra.mxu0 %v240
      %425 = vmatprep.subr.mxu0 0.0
      %426 = vmatpush1.msra.mxu0 %v245
      %427 = vmatprep.subr.mxu0 0.0
      %428 = vmatpush1.msra.mxu0 %v275
      %429 = vmatprep.subr.mxu0 0.0
      %430 = vmatpush1.msra.mxu0 0.0
      %431 = vmatprep.subr.mxu0 0.0
      %432 = vmatpush1.msra.mxu0 0.0
      %433 = vmatprep.subr.mxu0 0.0
      %434 = vmatpush1.msra.mxu0 0.0
      %435 = vmatprep.subr.mxu0 0.0
      %436 = vmatpush1.msra.mxu0 0.0
      %437 = vmatprep.subr.mxu0 0.0
      %438 = vmatpush1.msra.mxu0 0.0
      %439 = vmatprep.subr.mxu0 0.0
      %440 = vmatpush1.msra.mxu0 0.0
      %441 = vmatprep.subr.mxu0 0.0
      %442 = vmatpush1.msra.mxu0 0.0
      %443 = vmatprep.subr.mxu0 0.0
      %444 = vmatpush1.msra.mxu0 0.0
      %445 = vmatprep.subr.mxu0 0.0
      %446 = vmatpush1.msra.mxu0 0.0
      %447 = vmatprep.subr.mxu0 0.0
      %448 = vmatpush1.msra.mxu0 0.0
      %449 = vmatprep.subr.mxu0 0.0
      %450 = vmatpush1.msra.mxu0 0.0
      %451 = vmatprep.subr.mxu0 0.0
      %452 = vmatpush1.msra.mxu0 0.0
      %453 = vmatprep.subr.mxu0 0.0
      %454 = vmatpush1.msra.mxu0 0.0
      %455 = vmatprep.subr.mxu0 0.0
      %456 = vmatpush1.msra.mxu0 0.0
      %457 = vmatprep.subr.mxu0 0.0
      %458 = vmatpush1.msra.mxu0 0.0
      %459 = vmatprep.subr.mxu0 0.0
      %460 = vmatpush1.msra.mxu0 0.0
      %461 = vmatprep.subr.mxu0 0.0
      %462 = vmatpush1.msra.mxu0 0.0
      %463 = vmatprep.subr.mxu0 0.0
      %464 = vmatpush1.msra.mxu0 0.0
      %465 = vmatprep.subr.mxu0 0.0
      %466 = vmatpush1.msra.mxu0 0.0
      %467 = vmatprep.subr.mxu0 0.0
      %468 = vmatpush1.msra.mxu0 0.0
      %469 = vmatprep.subr.mxu0 0.0
      %470 = vmatpush1.msra.mxu0 0.0
      %471 = vmatprep.subr.mxu0 0.0
      %472 = vmatpush1.msra.mxu0 0.0
      %473 = vmatprep.subr.mxu0 0.0
      %474 = vmatpush1.msra.mxu0 0.0
      %475 = vmatprep.subr.mxu0 0.0
      %476 = vmatpush1.msra.mxu0 0.0
      %477 = vmatprep.subr.mxu0 0.0
      %478 = vmatpush1.msra.mxu0 0.0
      %479 = vmatprep.subr.mxu0 0.0
      %480 = vmatpush1.msra.mxu0 0.0
      %481 = vmatprep.subr.mxu0 0.0
      %482 = vmatpush1.msra.mxu0 0.0
      %483 = vmatprep.mubr.f32.mxu0 0.0
      %484 = vmatmul.mubr.f32.gmra.mrb[0].mxu0 %v259
      %v485 = vpop.f32.mrb[0].mxu0
      %v486 = vadd.f32 %v255, %v485
      %v487 = vpop.f32.mrb[0].mxu0
      %488 = vdwg.mxu0
      %v489 = vmax.f32 %v344, 0.0
      %v490 = vmax.f32 %v346, 0.0
      %v491 = vmax.f32 %v415, 0.0
      %v492 = vmax.f32 %v417, 0.0
      %v493 = vmax.f32 %v486, 0.0
      %499 = vrot.lane.b32.xlu0 %v489, 127
      %v500 = vpop.permute.xlu0 %499
      %501 = vrot.lane.b32.xlu0 %v490, 127
      %v502 = vpop.permute.xlu0 %501
      %503 = vrot.lane.b32.xlu0 %v491, 127
      %v504 = vpop.permute.xlu0 %503
      %505 = vrot.lane.b32.xlu0 %v492, 127
      %v506 = vpop.permute.xlu0 %505
      %507 = vrot.lane.b32.xlu0 %v493, 127
      %v508 = vpop.permute.xlu0 %507
      %vm509 = vcmask 1039360
      %v510 = vsel %vm509, %v500, %v502
      %v511 = vsel %vm509, %v502, %v504
      %v512 = vsel %vm509, %v504, %v506
      %v513 = vsel %vm509, %v506, %v508
      %519 = vrot.lane.b32.xlu0 %v489, 126
      %v520 = vpop.permute.xlu0 %519
      %521 = vrot.lane.b32.xlu0 %v490, 126
      %v522 = vpop.permute.xlu0 %521
      %523 = vrot.lane.b32.xlu0 %v491, 126
      %v524 = vpop.permute.xlu0 %523
      %525 = vrot.lane.b32.xlu0 %v492, 126
      %v526 = vpop.permute.xlu0 %525
      %527 = vrot.lane.b32.xlu0 %v493, 126
      %v528 = vpop.permute.xlu0 %527
      %vm529 = vcmask 1031168
      %v530 = vsel %vm529, %v520, %v522
      %v531 = vsel %vm529, %v522, %v524
      %v532 = vsel %vm529, %v524, %v526
      %v533 = vsel %vm529, %v526, %v528
      %539 = vrot.lane.b32.xlu0 %v489, 110
      %v540 = vpop.permute.xlu0 %539
      %541 = vrot.lane.b32.xlu0 %v490, 110
      %v542 = vpop.permute.xlu0 %541
      %543 = vrot.lane.b32.xlu0 %v491, 110
      %v544 = vpop.permute.xlu0 %543
      %545 = vrot.lane.b32.xlu0 %v492, 110
      %v546 = vpop.permute.xlu0 %545
      %547 = vrot.lane.b32.xlu0 %v493, 110
      %v548 = vpop.permute.xlu0 %547
      %vm549 = vcmask 900096
      %v550 = vsel %vm549, %v540, %v542
      %v551 = vsel %vm549, %v542, %v544
      %v552 = vsel %vm549, %v544, %v546
      %v553 = vsel %vm549, %v546, %v548
      %559 = vrot.lane.b32.xlu0 %v489, 109
      %v560 = vpop.permute.xlu0 %559
      %561 = vrot.lane.b32.xlu0 %v490, 109
      %v562 = vpop.permute.xlu0 %561
      %563 = vrot.lane.b32.xlu0 %v491, 109
      %v564 = vpop.permute.xlu0 %563
      %565 = vrot.lane.b32.xlu0 %v492, 109
      %v566 = vpop.permute.xlu0 %565
      %567 = vrot.lane.b32.xlu0 %v493, 109
      %v568 = vpop.permute.xlu0 %567
      %vm569 = vcmask 891904
      %v570 = vsel %vm569, %v560, %v562
      %v571 = vsel %vm569, %v562, %v564
      %v572 = vsel %vm569, %v564, %v566
      %v573 = vsel %vm569, %v566, %v568
      %579 = vrot.lane.b32.xlu0 %v489, 108
      %v580 = vpop.permute.xlu0 %579
      %581 = vrot.lane.b32.xlu0 %v490, 108
      %v582 = vpop.permute.xlu0 %581
      %583 = vrot.lane.b32.xlu0 %v491, 108
      %v584 = vpop.permute.xlu0 %583
      %585 = vrot.lane.b32.xlu0 %v492, 108
      %v586 = vpop.permute.xlu0 %585
      %587 = vrot.lane.b32.xlu0 %v493, 108
      %v588 = vpop.permute.xlu0 %587
      %vm589 = vcmask 883712
      %v590 = vsel %vm589, %v580, %v582
      %v591 = vsel %vm589, %v582, %v584
      %v592 = vsel %vm589, %v584, %v586
      %v593 = vsel %vm589, %v586, %v588
      %599 = vrot.lane.b32.xlu0 %v489, 92
      %v600 = vpop.permute.xlu0 %599
      %601 = vrot.lane.b32.xlu0 %v490, 92
      %v602 = vpop.permute.xlu0 %601
      %603 = vrot.lane.b32.xlu0 %v491, 92
      %v604 = vpop.permute.xlu0 %603
      %605 = vrot.lane.b32.xlu0 %v492, 92
      %v606 = vpop.permute.xlu0 %605
      %607 = vrot.lane.b32.xlu0 %v493, 92
      %v608 = vpop.permute.xlu0 %607
      %vm609 = vcmask 752640
      %v610 = vsel %vm609, %v600, %v602
      %v611 = vsel %vm609, %v602, %v604
      %v612 = vsel %vm609, %v604, %v606
      %v613 = vsel %vm609, %v606, %v608
      %619 = vrot.lane.b32.xlu0 %v489, 91
      %v620 = vpop.permute.xlu0 %619
      %621 = vrot.lane.b32.xlu0 %v490, 91
      %v622 = vpop.permute.xlu0 %621
      %623 = vrot.lane.b32.xlu0 %v491, 91
      %v624 = vpop.permute.xlu0 %623
      %625 = vrot.lane.b32.xlu0 %v492, 91
      %v626 = vpop.permute.xlu0 %625
      %627 = vrot.lane.b32.xlu0 %v493, 91
      %v628 = vpop.permute.xlu0 %627
      %vm629 = vcmask 744448
      %v630 = vsel %vm629, %v620, %v622
      %v631 = vsel %vm629, %v622, %v624
      %v632 = vsel %vm629, %v624, %v626
      %v633 = vsel %vm629, %v626, %v628
      %639 = vrot.lane.b32.xlu0 %v489, 90
      %v640 = vpop.permute.xlu0 %639
      %641 = vrot.lane.b32.xlu0 %v490, 90
      %v642 = vpop.permute.xlu0 %641
      %643 = vrot.lane.b32.xlu0 %v491, 90
      %v644 = vpop.permute.xlu0 %643
      %645 = vrot.lane.b32.xlu0 %v492, 90
      %v646 = vpop.permute.xlu0 %645
      %647 = vrot.lane.b32.xlu0 %v493, 90
      %v648 = vpop.permute.xlu0 %647
      %vm649 = vcmask 736256
      %v650 = vsel %vm649, %v640, %v642
      %v651 = vsel %vm649, %v642, %v644
      %v652 = vsel %vm649, %v644, %v646
      %v653 = vsel %vm649, %v646, %v648
      %v659 = vld [vmem:[%s3] sm:$0xff]
      %v660 = vld [vmem:[%s4] sm:$0xff]
      %662 = vset.pattern.permute.xlu0 0
      %663 = vperm.xlu0 %662, %v660
      %v664 = vpop.permute.xlu0 %663
      %vm666 = vcmask 588800
      %v668 = vsel %vm666, %v659, 0
      %670 = vmatprep.subr.mxu0 %v490
      %671 = vmatpush1.msra.mxu0 %v489
      %672 = vmatprep.subr.mxu0 %v511
      %673 = vmatpush1.msra.mxu0 %v510
      %674 = vmatprep.subr.mxu0 %v531
      %675 = vmatpush1.msra.mxu0 %v530
      %676 = vmatprep.subr.mxu0 %v551
      %677 = vmatpush1.msra.mxu0 %v550
      %678 = vmatprep.subr.mxu0 %v571
      %679 = vmatpush1.msra.mxu0 %v570
      %680 = vmatprep.subr.mxu0 %v591
      %681 = vmatpush1.msra.mxu0 %v590
      %682 = vmatprep.subr.mxu0 %v611
      %683 = vmatpush1.msra.mxu0 %v610
      %684 = vmatprep.subr.mxu0 %v631
      %685 = vmatpush1.msra.mxu0 %v630
      %686 = vmatprep.subr.mxu0 %v651
      %687 = vmatpush1.msra.mxu0 %v650
      %688 = vmatprep.subr.mxu0 0.0
      %689 = vmatpush1.msra.mxu0 0.0
      %690 = vmatprep.subr.mxu0 0.0
      %691 = vmatpush1.msra.mxu0 0.0
      %692 = vmatprep.subr.mxu0 0.0
      %693 = vmatpush1.msra.mxu0 0.0
      %694 = vmatprep.subr.mxu0 0.0
      %695 = vmatpush1.msra.mxu0 0.0
      %696 = vmatprep.subr.mxu0 0.0
      %697 = vmatpush1.msra.mxu0 0.0
      %698 = vmatprep.subr.mxu0 0.0
      %699 = vmatpush1.msra.mxu0 0.0
      %700 = vmatprep.subr.mxu0 0.0
      %701 = vmatpush1.msra.mxu0 0.0
      %702 = vmatprep.subr.mxu0 0.0
      %703 = vmatpush1.msra.mxu0 0.0
      %704 = vmatprep.subr.mxu0 0.0
      %705 = vmatpush1.msra.mxu0 0.0
      %706 = vmatprep.subr.mxu0 0.0
      %707 = vmatpush1.msra.mxu0 0.0
      %708 = vmatprep.subr.mxu0 0.0
      %709 = vmatpush1.msra.mxu0 0.0
      %710 = vmatprep.subr.mxu0 0.0
      %711 = vmatpush1.msra.mxu0 0.0
      %712 = vmatprep.subr.mxu0 0.0
      %713 = vmatpush1.msra.mxu0 0.0
      %714 = vmatprep.subr.mxu0 0.0
      %715 = vmatpush1.msra.mxu0 0.0
      %716 = vmatprep.subr.mxu0 0.0
      %717 = vmatpush1.msra.mxu0 0.0
      %718 = vmatprep.subr.mxu0 0.0
      %719 = vmatpush1.msra.mxu0 0.0
      %720 = vmatprep.subr.mxu0 0.0
      %721 = vmatpush1.msra.mxu0 0.0
      %722 = vmatprep.subr.mxu0 0.0
      %723 = vmatpush1.msra.mxu0 0.0
      %724 = vmatprep.subr.mxu0 0.0
      %725 = vmatpush1.msra.mxu0 0.0
      %726 = vmatprep.subr.mxu0 0.0
      %727 = vmatpush1.msra.mxu0 0.0
      %728 = vmatprep.subr.mxu0 0.0
      %729 = vmatpush1.msra.mxu0 0.0
      %730 = vmatprep.subr.mxu0 0.0
      %731 = vmatpush1.msra.mxu0 0.0
      %732 = vmatprep.subr.mxu0 0.0
      %733 = vmatpush1.msra.mxu0 0.0
      %734 = vmatprep.mubr.f32.mxu0 0.0
      %735 = vmatmul.mubr.f32.gmra.mrb[0].mxu0 %v668
      %v736 = vpop.f32.mrb[0].mxu0
      %v737 = vadd.f32 %v664, %v736
      %v738 = vpop.f32.mrb[0].mxu0
      %v739 = vadd.f32 %v664, %v738
      %740 = vdwg.mxu0
      %741 = vmatprep.subr.mxu0 %v492
      %742 = vmatpush1.msra.mxu0 %v491
      %743 = vmatprep.subr.mxu0 %v513
      %744 = vmatpush1.msra.mxu0 %v512
      %745 = vmatprep.subr.mxu0 %v533
      %746 = vmatpush1.msra.mxu0 %v532
      %747 = vmatprep.subr.mxu0 %v553
      %748 = vmatpush1.msra.mxu0 %v552
      %749 = vmatprep.subr.mxu0 %v573
      %750 = vmatpush1.msra.mxu0 %v572
      %751 = vmatprep.subr.mxu0 %v593
      %752 = vmatpush1.msra.mxu0 %v592
      %753 = vmatprep.subr.mxu0 %v613
      %754 = vmatpush1.msra.mxu0 %v612
      %755 = vmatprep.subr.mxu0 %v633
      %756 = vmatpush1.msra.mxu0 %v632
      %757 = vmatprep.subr.mxu0 %v653
      %758 = vmatpush1.msra.mxu0 %v652
      %759 = vmatprep.subr.mxu0 0.0
      %760 = vmatpush1.msra.mxu0 0.0
      %761 = vmatprep.subr.mxu0 0.0
      %762 = vmatpush1.msra.mxu0 0.0
      %763 = vmatprep.subr.mxu0 0.0
      %764 = vmatpush1.msra.mxu0 0.0
      %765 = vmatprep.subr.mxu0 0.0
      %766 = vmatpush1.msra.mxu0 0.0
      %767 = vmatprep.subr.mxu0 0.0
      %768 = vmatpush1.msra.mxu0 0.0
      %769 = vmatprep.subr.mxu0 0.0
      %770 = vmatpush1.msra.mxu0 0.0
      %771 = vmatprep.subr.mxu0 0.0
      %772 = vmatpush1.msra.mxu0 0.0
      %773 = vmatprep.subr.mxu0 0.0
      %774 = vmatpush1.msra.mxu0 0.0
      %775 = vmatprep.subr.mxu0 0.0
      %776 = vmatpush1.msra.mxu0 0.0
      %777 = vmatprep.subr.mxu0 0.0
      %778 = vmatpush1.msra.mxu0 0.0
      %779 = vmatprep.subr.mxu0 0.0
      %780 = vmatpush1.msra.mxu0 0.0
      %781 = vmatprep.subr.mxu0 0.0
      %782 = vmatpush1.msra.mxu0 0.0
      %783 = vmatprep.subr.mxu0 0.0
      %784 = vmatpush1.msra.mxu0 0.0
      %785 = vmatprep.subr.mxu0 0.0
      %786 = vmatpush1.msra.mxu0 0.0
      %787 = vmatprep.subr.mxu0 0.0
      %788 = vmatpush1.msra.mxu0 0.0
      %789 = vmatprep.subr.mxu0 0.0
      %790 = vmatpush1.msra.mxu0 0.0
      %791 = vmatprep.subr.mxu0 0.0
      %792 = vmatpush1.msra.mxu0 0.0
      %793 = vmatprep.subr.mxu0 0.0
      %794 = vmatpush1.msra.mxu0 0.0
      %795 = vmatprep.subr.mxu0 0.0
      %796 = vmatpush1.msra.mxu0 0.0
      %797 = vmatprep.subr.mxu0 0.0
      %798 = vmatpush1.msra.mxu0 0.0
      %799 = vmatprep.subr.mxu0 0.0
      %800 = vmatpush1.msra.mxu0 0.0
      %801 = vmatprep.subr.mxu0 0.0
      %802 = vmatpush1.msra.mxu0 0.0
      %803 = vmatprep.subr.mxu0 0.0
      %804 = vmatpush1.msra.mxu0 0.0
      %805 = vmatprep.mubr.f32.mxu0 0.0
      %806 = vmatmul.mubr.f32.gmra.mrb[0].mxu0 %v668
      %v807 = vpop.f32.mrb[0].mxu0
      %v808 = vadd.f32 %v664, %v807
      %v809 = vpop.f32.mrb[0].mxu0
      %v810 = vadd.f32 %v664, %v809
      %811 = vdwg.mxu0
      %812 = vmatprep.subr.mxu0 0.0
      %813 = vmatpush1.msra.mxu0 %v493
      %814 = vmatprep.subr.mxu0 0.0
      %815 = vmatpush1.msra.mxu0 %v508
      %816 = vmatprep.subr.mxu0 0.0
      %817 = vmatpush1.msra.mxu0 %v528
      %818 = vmatprep.subr.mxu0 0.0
      %819 = vmatpush1.msra.mxu0 %v548
      %820 = vmatprep.subr.mxu0 0.0
      %821 = vmatpush1.msra.mxu0 %v568
      %822 = vmatprep.subr.mxu0 0.0
      %823 = vmatpush1.msra.mxu0 %v588
      %824 = vmatprep.subr.mxu0 0.0
      %825 = vmatpush1.msra.mxu0 %v608
      %826 = vmatprep.subr.mxu0 0.0
      %827 = vmatpush1.msra.mxu0 %v628
      %828 = vmatprep.subr.mxu0 0.0
      %829 = vmatpush1.msra.mxu0 %v648
      %830 = vmatprep.subr.mxu0 0.0
      %831 = vmatpush1.msra.mxu0 0.0
      %832 = vmatprep.subr.mxu0 0.0
      %833 = vmatpush1.msra.mxu0 0.0
      %834 = vmatprep.subr.mxu0 0.0
      %835 = vmatpush1.msra.mxu0 0.0
      %836 = vmatprep.subr.mxu0 0.0
      %837 = vmatpush1.msra.mxu0 0.0
      %838 = vmatprep.subr.mxu0 0.0
      %839 = vmatpush1.msra.mxu0 0.0
      %840 = vmatprep.subr.mxu0 0.0
      %841 = vmatpush1.msra.mxu0 0.0
      %842 = vmatprep.subr.mxu0 0.0
      %843 = vmatpush1.msra.mxu0 0.0
      %844 = vmatprep.subr.mxu0 0.0
      %845 = vmatpush1.msra.mxu0 0.0
      %846 = vmatprep.subr.mxu0 0.0
      %847 = vmatpush1.msra.mxu0 0.0
      %848 = vmatprep.subr.mxu0 0.0
      %849 = vmatpush1.msra.mxu0 0.0
      %850 = vmatprep.subr.mxu0 0.0
      %851 = vmatpush1.msra.mxu0 0.0
      %852 = vmatprep.subr.mxu0 0.0
      %853 = vmatpush1.msra.mxu0 0.0
      %854 = vmatprep.subr.mxu0 0.0
      %855 = vmatpush1.msra.mxu0 0.0
      %856 = vmatprep.subr.mxu0 0.0
      %857 = vmatpush1.msra.mxu0 0.0
      %858 = vmatprep.subr.mxu0 0.0
      %859 = vmatpush1.msra.mxu0 0.0
      %860 = vmatprep.subr.mxu0 0.0
      %861 = vmatpush1.msra.mxu0 0.0
      %862 = vmatprep.subr.mxu0 0.0
      %863 = vmatpush1.msra.mxu0 0.0
      %864 = vmatprep.subr.mxu0 0.0
      %865 = vmatpush1.msra.mxu0 0.0
      %866 = vmatprep.subr.mxu0 0.0
      %867 = vmatpush1.msra.mxu0 0.0
      %868 = vmatprep.subr.mxu0 0.0
      %869 = vmatpush1.msra.mxu0 0.0
      %870 = vmatprep.subr.mxu0 0.0
      %871 = vmatpush1.msra.mxu0 0.0
      %872 = vmatprep.subr.mxu0 0.0
      %873 = vmatpush1.msra.mxu0 0.0
      %874 = vmatprep.subr.mxu0 0.0
      %875 = vmatpush1.msra.mxu0 0.0
      %876 = vmatprep.mubr.f32.mxu0 0.0
      %877 = vmatmul.mubr.f32.gmra.mrb[0].mxu0 %v668
      %v878 = vpop.f32.mrb[0].mxu0
      %v879 = vadd.f32 %v664, %v878
      %v880 = vpop.f32.mrb[0].mxu0
      %881 = vdwg.mxu0
      %v882 = vmax.f32 %v737, 0.0
      %v883 = vmax.f32 %v739, 0.0
      %v884 = vmax.f32 %v808, 0.0
      %v885 = vmax.f32 %v810, 0.0
      %v886 = vmax.f32 %v879, 0.0
      %888 = vset.pattern.permute.xlu0 0
      %889 = vperm.xlu0 %888, %v882
      %v890 = vpop.permute.xlu0 %889
      %v892 = vmul.f32 %v890, %v883
      %v893 = vmul.f32 %v890, %v884
      %v894 = vmul.f32 %v890, %v885
      %895 = vset.pattern.permute.xlu0 1
      %896 = vperm.xlu0 %895, %v882
      %v897 = vpop.permute.xlu0 %896
      %v899 = vmul.f32 %v897, %v883
      %v900 = vmul.f32 %v897, %v884
      %v901 = vmul.f32 %v897, %v885
      %905 = vrot.lane.b32.xlu0 %v899, 127
      %v906 = vpop.permute.xlu0 %905
      %907 = vrot.lane.b32.xlu0 %v900, 127
      %v908 = vpop.permute.xlu0 %907
      %909 = vrot.lane.b32.xlu0 %v901, 127
      %v910 = vpop.permute.xlu0 %909
      %v911 = vsel %vm509, %v906, %v908
      %v912 = vsel %vm509, %v908, %v910
      %v916 = vadd.f32 %v892, %v911
      %v917 = vadd.f32 %v893, %v912
      %v918 = vadd.f32 %v894, %v910
      %919 = vset.pattern.permute.xlu0 2
      %920 = vperm.xlu0 %919, %v882
      %v921 = vpop.permute.xlu0 %920
      %v923 = vmul.f32 %v921, %v883
      %v924 = vmul.f32 %v921, %v884
      %v925 = vmul.f32 %v921, %v885
      %929 = vrot.lane.b32.xlu0 %v923, 126
      %v930 = vpop.permute.xlu0 %929
      %931 = vrot.lane.b32.xlu0 %v924, 126
      %v932 = vpop.permute.xlu0 %931
      %933 = vrot.lane.b32.xlu0 %v925, 126
      %v934 = vpop.permute.xlu0 %933
      %v935 = vsel %vm529, %v930, %v932
      %v936 = vsel %vm529, %v932, %v934
      %v940 = vadd.f32 %v916, %v935
      %v941 = vadd.f32 %v917, %v936
      %v942 = vadd.f32 %v918, %v934
      %943 = vset.pattern.permute.xlu0 3
      %944 = vperm.xlu0 %943, %v882
      %v945 = vpop.permute.xlu0 %944
      %v947 = vmul.f32 %v945, %v883
      %v948 = vmul.f32 %v945, %v884
      %v949 = vmul.f32 %v945, %v885
      %953 = vrot.lane.b32.xlu0 %v947, 125
      %v954 = vpop.permute.xlu0 %953
      %955 = vrot.lane.b32.xlu0 %v948, 125
      %v956 = vpop.permute.xlu0 %955
      %957 = vrot.lane.b32.xlu0 %v949, 125
      %v958 = vpop.permute.xlu0 %957
      %vm959 = vcmask 1022976
      %v960 = vsel %vm959, %v954, %v956
      %v961 = vsel %vm959, %v956, %v958
      %v965 = vadd.f32 %v940, %v960
      %v966 = vadd.f32 %v941, %v961
      %v967 = vadd.f32 %v942, %v958
      %968 = vset.pattern.permute.xlu0 4
      %969 = vperm.xlu0 %968, %v882
      %v970 = vpop.permute.xlu0 %969
      %v972 = vmul.f32 %v970, %v883
      %v973 = vmul.f32 %v970, %v884
      %v974 = vmul.f32 %v970, %v885
      %978 = vrot.lane.b32.xlu0 %v972, 124
      %v979 = vpop.permute.xlu0 %978
      %980 = vrot.lane.b32.xlu0 %v973, 124
      %v981 = vpop.permute.xlu0 %980
      %982 = vrot.lane.b32.xlu0 %v974, 124
      %v983 = vpop.permute.xlu0 %982
      %vm984 = vcmask 1014784
      %v985 = vsel %vm984, %v979, %v981
      %v986 = vsel %vm984, %v981, %v983
      %v990 = vadd.f32 %v965, %v985
      %v991 = vadd.f32 %v966, %v986
      %v992 = vadd.f32 %v967, %v983
      %993 = vset.pattern.permute.xlu0 5
      %994 = vperm.xlu0 %993, %v882
      %v995 = vpop.permute.xlu0 %994
      %v997 = vmul.f32 %v995, %v883
      %v998 = vmul.f32 %v995, %v884
      %v999 = vmul.f32 %v995, %v885
      %1003 = vrot.lane.b32.xlu0 %v997, 123
      %v1004 = vpop.permute.xlu0 %1003
      %1005 = vrot.lane.b32.xlu0 %v998, 123
      %v1006 = vpop.permute.xlu0 %1005
      %1007 = vrot.lane.b32.xlu0 %v999, 123
      %v1008 = vpop.permute.xlu0 %1007
      %vm1009 = vcmask 1006592
      %v1010 = vsel %vm1009, %v1004, %v1006
      %v1011 = vsel %vm1009, %v1006, %v1008
      %v1015 = vadd.f32 %v990, %v1010
      %v1016 = vadd.f32 %v991, %v1011
      %v1017 = vadd.f32 %v992, %v1008
      %1018 = vset.pattern.permute.xlu0 18
      %1019 = vperm.xlu0 %1018, %v882
      %v1020 = vpop.permute.xlu0 %1019
      %v1022 = vmul.f32 %v1020, %v883
      %v1023 = vmul.f32 %v1020, %v884
      %v1024 = vmul.f32 %v1020, %v885
      %1025 = vset.pattern.permute.xlu0 19
      %1026 = vperm.xlu0 %1025, %v882
      %v1027 = vpop.permute.xlu0 %1026
      %v1029 = vmul.f32 %v1027, %v883
      %v1030 = vmul.f32 %v1027, %v884
      %v1031 = vmul.f32 %v1027, %v885
      %1035 = vrot.lane.b32.xlu0 %v1029, 127
      %v1036 = vpop.permute.xlu0 %1035
      %1037 = vrot.lane.b32.xlu0 %v1030, 127
      %v1038 = vpop.permute.xlu0 %1037
      %1039 = vrot.lane.b32.xlu0 %v1031, 127
      %v1040 = vpop.permute.xlu0 %1039
      %v1041 = vsel %vm509, %v1036, %v1038
      %v1042 = vsel %vm509, %v1038, %v1040
      %v1046 = vadd.f32 %v1022, %v1041
      %v1047 = vadd.f32 %v1023, %v1042
      %v1048 = vadd.f32 %v1024, %v1040
      %1049 = vset.pattern.permute.xlu0 20
      %1050 = vperm.xlu0 %1049, %v882
      %v1051 = vpop.permute.xlu0 %1050
      %v1053 = vmul.f32 %v1051, %v883
      %v1054 = vmul.f32 %v1051, %v884
      %v1055 = vmul.f32 %v1051, %v885
      %1059 = vrot.lane.b32.xlu0 %v1053, 126
      %v1060 = vpop.permute.xlu0 %1059
      %1061 = vrot.lane.b32.xlu0 %v1054, 126
      %v1062 = vpop.permute.xlu0 %1061
      %1063 = vrot.lane.b32.xlu0 %v1055, 126
      %v1064 = vpop.permute.xlu0 %1063
      %v1065 = vsel %vm529, %v1060, %v1062
      %v1066 = vsel %vm529, %v1062, %v1064
      %v1070 = vadd.f32 %v1046, %v1065
      %v1071 = vadd.f32 %v1047, %v1066
      %v1072 = vadd.f32 %v1048, %v1064
      %1073 = vset.pattern.permute.xlu0 21
      %1074 = vperm.xlu0 %1073, %v882
      %v1075 = vpop.permute.xlu0 %1074
      %v1077 = vmul.f32 %v1075, %v883
      %v1078 = vmul.f32 %v1075, %v884
      %v1079 = vmul.f32 %v1075, %v885
      %1083 = vrot.lane.b32.xlu0 %v1077, 125
      %v1084 = vpop.permute.xlu0 %1083
      %1085 = vrot.lane.b32.xlu0 %v1078, 125
      %v1086 = vpop.permute.xlu0 %1085
      %1087 = vrot.lane.b32.xlu0 %v1079, 125
      %v1088 = vpop.permute.xlu0 %1087
      %v1089 = vsel %vm959, %v1084, %v1086
      %v1090 = vsel %vm959, %v1086, %v1088
      %v1094 = vadd.f32 %v1070, %v1089
      %v1095 = vadd.f32 %v1071, %v1090
      %v1096 = vadd.f32 %v1072, %v1088
      %1097 = vset.pattern.permute.xlu0 22
      %1098 = vperm.xlu0 %1097, %v882
      %v1099 = vpop.permute.xlu0 %1098
      %v1101 = vmul.f32 %v1099, %v883
      %v1102 = vmul.f32 %v1099, %v884
      %v1103 = vmul.f32 %v1099, %v885
      %1107 = vrot.lane.b32.xlu0 %v1101, 124
      %v1108 = vpop.permute.xlu0 %1107
      %1109 = vrot.lane.b32.xlu0 %v1102, 124
      %v1110 = vpop.permute.xlu0 %1109
      %1111 = vrot.lane.b32.xlu0 %v1103, 124
      %v1112 = vpop.permute.xlu0 %1111
      %v1113 = vsel %vm984, %v1108, %v1110
      %v1114 = vsel %vm984, %v1110, %v1112
      %v1118 = vadd.f32 %v1094, %v1113
      %v1119 = vadd.f32 %v1095, %v1114
      %v1120 = vadd.f32 %v1096, %v1112
      %1121 = vset.pattern.permute.xlu0 23
      %1122 = vperm.xlu0 %1121, %v882
      %v1123 = vpop.permute.xlu0 %1122
      %v1125 = vmul.f32 %v1123, %v883
      %v1126 = vmul.f32 %v1123, %v884
      %v1127 = vmul.f32 %v1123, %v885
      %1131 = vrot.lane.b32.xlu0 %v1125, 123
      %v1132 = vpop.permute.xlu0 %1131
      %1133 = vrot.lane.b32.xlu0 %v1126, 123
      %v1134 = vpop.permute.xlu0 %1133
      %1135 = vrot.lane.b32.xlu0 %v1127, 123
      %v1136 = vpop.permute.xlu0 %1135
      %v1137 = vsel %vm1009, %v1132, %v1134
      %v1138 = vsel %vm1009, %v1134, %v1136
      %v1142 = vadd.f32 %v1118, %v1137
      %v1143 = vadd.f32 %v1119, %v1138
      %v1144 = vadd.f32 %v1120, %v1136
      %1145 = vset.pattern.permute.xlu0 36
      %1146 = vperm.xlu0 %1145, %v882
      %v1147 = vpop.permute.xlu0 %1146
      %v1149 = vmul.f32 %v1147, %v883
      %v1150 = vmul.f32 %v1147, %v884
      %v1151 = vmul.f32 %v1147, %v885
      %1152 = vset.pattern.permute.xlu0 37
      %1153 = vperm.xlu0 %1152, %v882
      %v1154 = vpop.permute.xlu0 %1153
      %v1156 = vmul.f32 %v1154, %v883
      %v1157 = vmul.f32 %v1154, %v884
      %v1158 = vmul.f32 %v1154, %v885
      %1162 = vrot.lane.b32.xlu0 %v1156, 127
      %v1163 = vpop.permute.xlu0 %1162
      %1164 = vrot.lane.b32.xlu0 %v1157, 127
      %v1165 = vpop.permute.xlu0 %1164
      %1166 = vrot.lane.b32.xlu0 %v1158, 127
      %v1167 = vpop.permute.xlu0 %1166
      %v1168 = vsel %vm509, %v1163, %v1165
      %v1169 = vsel %vm509, %v1165, %v1167
      %v1173 = vadd.f32 %v1149, %v1168
      %v1174 = vadd.f32 %v1150, %v1169
      %v1175 = vadd.f32 %v1151, %v1167
      %1176 = vset.pattern.permute.xlu0 38
      %1177 = vperm.xlu0 %1176, %v882
      %v1178 = vpop.permute.xlu0 %1177
      %v1180 = vmul.f32 %v1178, %v883
      %v1181 = vmul.f32 %v1178, %v884
      %v1182 = vmul.f32 %v1178, %v885
      %1186 = vrot.lane.b32.xlu0 %v1180, 126
      %v1187 = vpop.permute.xlu0 %1186
      %1188 = vrot.lane.b32.xlu0 %v1181, 126
      %v1189 = vpop.permute.xlu0 %1188
      %1190 = vrot.lane.b32.xlu0 %v1182, 126
      %v1191 = vpop.permute.xlu0 %1190
      %v1192 = vsel %vm529, %v1187, %v1189
      %v1193 = vsel %vm529, %v1189, %v1191
      %v1197 = vadd.f32 %v1173, %v1192
      %v1198 = vadd.f32 %v1174, %v1193
      %v1199 = vadd.f32 %v1175, %v1191
      %1200 = vset.pattern.permute.xlu0 39
      %1201 = vperm.xlu0 %1200, %v882
      %v1202 = vpop.permute.xlu0 %1201
      %v1204 = vmul.f32 %v1202, %v883
      %v1205 = vmul.f32 %v1202, %v884
      %v1206 = vmul.f32 %v1202, %v885
      %1210 = vrot.lane.b32.xlu0 %v1204, 125
      %v1211 = vpop.permute.xlu0 %1210
      %1212 = vrot.lane.b32.xlu0 %v1205, 125
      %v1213 = vpop.permute.xlu0 %1212
      %1214 = vrot.lane.b32.xlu0 %v1206, 125
      %v1215 = vpop.permute.xlu0 %1214
      %v1216 = vsel %vm959, %v1211, %v1213
      %v1217 = vsel %vm959, %v1213, %v1215
      %v1221 = vadd.f32 %v1197, %v1216
      %v1222 = vadd.f32 %v1198, %v1217
      %v1223 = vadd.f32 %v1199, %v1215
      %1224 = vset.pattern.permute.xlu0 40
      %1225 = vperm.xlu0 %1224, %v882
      %v1226 = vpop.permute.xlu0 %1225
      %v1228 = vmul.f32 %v1226, %v883
      %v1229 = vmul.f32 %v1226, %v884
      %v1230 = vmul.f32 %v1226, %v885
      %1234 = vrot.lane.b32.xlu0 %v1228, 124
      %v1235 = vpop.permute.xlu0 %1234
      %1236 = vrot.lane.b32.xlu0 %v1229, 124
      %v1237 = vpop.permute.xlu0 %1236
      %1238 = vrot.lane.b32.xlu0 %v1230, 124
      %v1239 = vpop.permute.xlu0 %1238
      %v1240 = vsel %vm984, %v1235, %v1237
      %v1241 = vsel %vm984, %v1237, %v1239
      %v1245 = vadd.f32 %v1221, %v1240
      %v1246 = vadd.f32 %v1222, %v1241
      %v1247 = vadd.f32 %v1223, %v1239
      %1248 = vset.pattern.permute.xlu0 41
      %1249 = vperm.xlu0 %1248, %v882
      %v1250 = vpop.permute.xlu0 %1249
      %v1252 = vmul.f32 %v1250, %v883
      %v1253 = vmul.f32 %v1250, %v884
      %v1254 = vmul.f32 %v1250, %v885
      %1258 = vrot.lane.b32.xlu0 %v1252, 123
      %v1259 = vpop.permute.xlu0 %1258
      %1260 = vrot.lane.b32.xlu0 %v1253, 123
      %v1261 = vpop.permute.xlu0 %1260
      %1262 = vrot.lane.b32.xlu0 %v1254, 123
      %v1263 = vpop.permute.xlu0 %1262
      %v1264 = vsel %vm1009, %v1259, %v1261
      %v1265 = vsel %vm1009, %v1261, %v1263
      %v1269 = vadd.f32 %v1245, %v1264
      %v1270 = vadd.f32 %v1246, %v1265
      %v1271 = vadd.f32 %v1247, %v1263
      %1272 = vset.pattern.permute.xlu0 54
      %1273 = vperm.xlu0 %1272, %v882
      %v1274 = vpop.permute.xlu0 %1273
      %v1276 = vmul.f32 %v1274, %v883
      %v1277 = vmul.f32 %v1274, %v884
      %v1278 = vmul.f32 %v1274, %v885
      %1279 = vset.pattern.permute.xlu0 55
      %1280 = vperm.xlu0 %1279, %v882
      %v1281 = vpop.permute.xlu0 %1280
      %v1283 = vmul.f32 %v1281, %v883
      %v1284 = vmul.f32 %v1281, %v884
      %v1285 = vmul.f32 %v1281, %v885
      %1289 = vrot.lane.b32.xlu0 %v1283, 127
      %v1290 = vpop.permute.xlu0 %1289
      %1291 = vrot.lane.b32.xlu0 %v1284, 127
      %v1292 = vpop.permute.xlu0 %1291
      %1293 = vrot.lane.b32.xlu0 %v1285, 127
      %v1294 = vpop.permute.xlu0 %1293
      %v1295 = vsel %vm509, %v1290, %v1292
      %v1296 = vsel %vm509, %v1292, %v1294
      %v1300 = vadd.f32 %v1276, %v1295
      %v1301 = vadd.f32 %v1277, %v1296
      %v1302 = vadd.f32 %v1278, %v1294
      %1303 = vset.pattern.permute.xlu0 56
      %1304 = vperm.xlu0 %1303, %v882
      %v1305 = vpop.permute.xlu0 %1304
      %v1307 = vmul.f32 %v1305, %v883
      %v1308 = vmul.f32 %v1305, %v884
      %v1309 = vmul.f32 %v1305, %v885
      %1313 = vrot.lane.b32.xlu0 %v1307, 126
      %v1314 = vpop.permute.xlu0 %1313
      %1315 = vrot.lane.b32.xlu0 %v1308, 126
      %v1316 = vpop.permute.xlu0 %1315
      %1317 = vrot.lane.b32.xlu0 %v1309, 126
      %v1318 = vpop.permute.xlu0 %1317
      %v1319 = vsel %vm529, %v1314, %v1316
      %v1320 = vsel %vm529, %v1316, %v1318
      %v1324 = vadd.f32 %v1300, %v1319
      %v1325 = vadd.f32 %v1301, %v1320
      %v1326 = vadd.f32 %v1302, %v1318
      %1327 = vset.pattern.permute.xlu0 57
      %1328 = vperm.xlu0 %1327, %v882
      %v1329 = vpop.permute.xlu0 %1328
      %v1331 = vmul.f32 %v1329, %v883
      %v1332 = vmul.f32 %v1329, %v884
      %v1333 = vmul.f32 %v1329, %v885
      %1337 = vrot.lane.b32.xlu0 %v1331, 125
      %v1338 = vpop.permute.xlu0 %1337
      %1339 = vrot.lane.b32.xlu0 %v1332, 125
      %v1340 = vpop.permute.xlu0 %1339
      %1341 = vrot.lane.b32.xlu0 %v1333, 125
      %v1342 = vpop.permute.xlu0 %1341
      %v1343 = vsel %vm959, %v1338, %v1340
      %v1344 = vsel %vm959, %v1340, %v1342
      %v1348 = vadd.f32 %v1324, %v1343
      %v1349 = vadd.f32 %v1325, %v1344
      %v1350 = vadd.f32 %v1326, %v1342
      %1351 = vset.pattern.permute.xlu0 58
      %1352 = vperm.xlu0 %1351, %v882
      %v1353 = vpop.permute.xlu0 %1352
      %v1355 = vmul.f32 %v1353, %v883
      %v1356 = vmul.f32 %v1353, %v884
      %v1357 = vmul.f32 %v1353, %v885
      %1361 = vrot.lane.b32.xlu0 %v1355, 124
      %v1362 = vpop.permute.xlu0 %1361
      %1363 = vrot.lane.b32.xlu0 %v1356, 124
      %v1364 = vpop.permute.xlu0 %1363
      %1365 = vrot.lane.b32.xlu0 %v1357, 124
      %v1366 = vpop.permute.xlu0 %1365
      %v1367 = vsel %vm984, %v1362, %v1364
      %v1368 = vsel %vm984, %v1364, %v1366
      %v1372 = vadd.f32 %v1348, %v1367
      %v1373 = vadd.f32 %v1349, %v1368
      %v1374 = vadd.f32 %v1350, %v1366
      %1375 = vset.pattern.permute.xlu0 59
      %1376 = vperm.xlu0 %1375, %v882
      %v1377 = vpop.permute.xlu0 %1376
      %v1379 = vmul.f32 %v1377, %v883
      %v1380 = vmul.f32 %v1377, %v884
      %v1381 = vmul.f32 %v1377, %v885
      %1385 = vrot.lane.b32.xlu0 %v1379, 123
      %v1386 = vpop.permute.xlu0 %1385
      %1387 = vrot.lane.b32.xlu0 %v1380, 123
      %v1388 = vpop.permute.xlu0 %1387
      %1389 = vrot.lane.b32.xlu0 %v1381, 123
      %v1390 = vpop.permute.xlu0 %1389
      %v1391 = vsel %vm1009, %v1386, %v1388
      %v1392 = vsel %vm1009, %v1388, %v1390
      %v1396 = vadd.f32 %v1372, %v1391
      %v1397 = vadd.f32 %v1373, %v1392
      %v1398 = vadd.f32 %v1374, %v1390
      %1399 = vset.pattern.permute.xlu0 72
      %1400 = vperm.xlu0 %1399, %v882
      %v1401 = vpop.permute.xlu0 %1400
      %v1403 = vmul.f32 %v1401, %v883
      %v1404 = vmul.f32 %v1401, %v884
      %v1405 = vmul.f32 %v1401, %v885
      %1406 = vset.pattern.permute.xlu0 73
      %1407 = vperm.xlu0 %1406, %v882
      %v1408 = vpop.permute.xlu0 %1407
      %v1410 = vmul.f32 %v1408, %v883
      %v1411 = vmul.f32 %v1408, %v884
      %v1412 = vmul.f32 %v1408, %v885
      %1416 = vrot.lane.b32.xlu0 %v1410, 127
      %v1417 = vpop.permute.xlu0 %1416
      %1418 = vrot.lane.b32.xlu0 %v1411, 127
      %v1419 = vpop.permute.xlu0 %1418
      %1420 = vrot.lane.b32.xlu0 %v1412, 127
      %v1421 = vpop.permute.xlu0 %1420
      %v1422 = vsel %vm509, %v1417, %v1419
      %v1423 = vsel %vm509, %v1419, %v1421
      %v1427 = vadd.f32 %v1403, %v1422
      %v1428 = vadd.f32 %v1404, %v1423
      %v1429 = vadd.f32 %v1405, %v1421
      %1430 = vset.pattern.permute.xlu0 74
      %1431 = vperm.xlu0 %1430, %v882
      %v1432 = vpop.permute.xlu0 %1431
      %v1434 = vmul.f32 %v1432, %v883
      %v1435 = vmul.f32 %v1432, %v884
      %v1436 = vmul.f32 %v1432, %v885
      %1440 = vrot.lane.b32.xlu0 %v1434, 126
      %v1441 = vpop.permute.xlu0 %1440
      %1442 = vrot.lane.b32.xlu0 %v1435, 126
      %v1443 = vpop.permute.xlu0 %1442
      %1444 = vrot.lane.b32.xlu0 %v1436, 126
      %v1445 = vpop.permute.xlu0 %1444
      %v1446 = vsel %vm529, %v1441, %v1443
      %v1447 = vsel %vm529, %v1443, %v1445
      %v1451 = vadd.f32 %v1427, %v1446
      %v1452 = vadd.f32 %v1428, %v1447
      %v1453 = vadd.f32 %v1429, %v1445
      %1454 = vset.pattern.permute.xlu0 75
      %1455 = vperm.xlu0 %1454, %v882
      %v1456 = vpop.permute.xlu0 %1455
      %v1458 = vmul.f32 %v1456, %v883
      %v1459 = vmul.f32 %v1456, %v884
      %v1460 = vmul.f32 %v1456, %v885
      %1464 = vrot.lane.b32.xlu0 %v1458, 125
      %v1465 = vpop.permute.xlu0 %1464
      %1466 = vrot.lane.b32.xlu0 %v1459, 125
      %v1467 = vpop.permute.xlu0 %1466
      %1468 = vrot.lane.b32.xlu0 %v1460, 125
      %v1469 = vpop.permute.xlu0 %1468
      %v1470 = vsel %vm959, %v1465, %v1467
      %v1471 = vsel %vm959, %v1467, %v1469
      %v1475 = vadd.f32 %v1451, %v1470
      %v1476 = vadd.f32 %v1452, %v1471
      %v1477 = vadd.f32 %v1453, %v1469
      %1478 = vset.pattern.permute.xlu0 76
      %1479 = vperm.xlu0 %1478, %v882
      %v1480 = vpop.permute.xlu0 %1479
      %v1482 = vmul.f32 %v1480, %v884
      %v1483 = vmul.f32 %v1480, %v885
      %1486 = vrot.lane.b32.xlu0 %v1482, 124
      %v1487 = vpop.permute.xlu0 %1486
      %1488 = vrot.lane.b32.xlu0 %v1483, 124
      %v1489 = vpop.permute.xlu0 %1488
      %v1490 = vsel %vm984, %v1487, %v1489
      %v1494 = vadd.f32 %v1475, %v1487
      %v1495 = vadd.f32 %v1476, %v1490
      %v1496 = vadd.f32 %v1477, %v1489
      %1497 = vset.pattern.permute.xlu0 77
      %1498 = vperm.xlu0 %1497, %v882
      %v1499 = vpop.permute.xlu0 %1498
      %v1501 = vmul.f32 %v1499, %v884
      %v1502 = vmul.f32 %v1499, %v885
      %v1503 = vmul.f32 %v1499, %v886
      %1507 = vrot.lane.b32.xlu0 %v1501, 123
      %v1508 = vpop.permute.xlu0 %1507
      %1509 = vrot.lane.b32.xlu0 %v1502, 123
      %v1510 = vpop.permute.xlu0 %1509
      %1511 = vrot.lane.b32.xlu0 %v1503, 123
      %v1512 = vpop.permute.xlu0 %1511
      %v1513 = vsel %vm1009, %v1508, %v1510
      %v1514 = vsel %vm1009, %v1510, %v1512
      %v1518 = vadd.f32 %v1494, %v1508
      %v1519 = vadd.f32 %v1495, %v1513
      %v1520 = vadd.f32 %v1496, %v1514
      %1521 = vset.pattern.permute.xlu0 90
      %1522 = vperm.xlu0 %1521, %v882
      %v1523 = vpop.permute.xlu0 %1522
      %v1525 = vmul.f32 %v1523, %v884
      %v1526 = vmul.f32 %v1523, %v885
      %v1527 = vmul.f32 %v1523, %v886
      %1528 = vset.pattern.permute.xlu0 91
      %1529 = vperm.xlu0 %1528, %v882
      %v1530 = vpop.permute.xlu0 %1529
      %v1532 = vmul.f32 %v1530, %v884
      %v1533 = vmul.f32 %v1530, %v885
      %v1534 = vmul.f32 %v1530, %v886
      %1538 = vrot.lane.b32.xlu0 %v1532, 127
      %v1539 = vpop.permute.xlu0 %1538
      %1540 = vrot.lane.b32.xlu0 %v1533, 127
      %v1541 = vpop.permute.xlu0 %1540
      %1542 = vrot.lane.b32.xlu0 %v1534, 127
      %v1543 = vpop.permute.xlu0 %1542
      %v1544 = vsel %vm509, %v1539, %v1541
      %v1545 = vsel %vm509, %v1541, %v1543
      %v1549 = vadd.f32 %v1525, %v1544
      %v1550 = vadd.f32 %v1526, %v1545
      %v1551 = vadd.f32 %v1527, %v1543
      %1552 = vset.pattern.permute.xlu0 92
      %1553 = vperm.xlu0 %1552, %v882
      %v1554 = vpop.permute.xlu0 %1553
      %v1556 = vmul.f32 %v1554, %v884
      %v1557 = vmul.f32 %v1554, %v885
      %v1558 = vmul.f32 %v1554, %v886
      %1562 = vrot.lane.b32.xlu0 %v1556, 126
      %v1563 = vpop.permute.xlu0 %1562
      %1564 = vrot.lane.b32.xlu0 %v1557, 126
      %v1565 = vpop.permute.xlu0 %1564
      %1566 = vrot.lane.b32.xlu0 %v1558, 126
      %v1567 = vpop.permute.xlu0 %1566
      %v1568 = vsel %vm529, %v1563, %v1565
      %v1569 = vsel %vm529, %v1565, %v1567
      %v1573 = vadd.f32 %v1549, %v1568
      %v1574 = vadd.f32 %v1550, %v1569
      %v1575 = vadd.f32 %v1551, %v1567
      %1576 = vset.pattern.permute.xlu0 93
      %1577 = vperm.xlu0 %1576, %v882
      %v1578 = vpop.permute.xlu0 %1577
      %v1580 = vmul.f32 %v1578, %v884
      %v1581 = vmul.f32 %v1578, %v885
      %v1582 = vmul.f32 %v1578, %v886
      %1586 = vrot.lane.b32.xlu0 %v1580, 125
      %v1587 = vpop.permute.xlu0 %1586
      %1588 = vrot.lane.b32.xlu0 %v1581, 125
      %v1589 = vpop.permute.xlu0 %1588
      %1590 = vrot.lane.b32.xlu0 %v1582, 125
      %v1591 = vpop.permute.xlu0 %1590
      %v1592 = vsel %vm959, %v1587, %v1589
      %v1593 = vsel %vm959, %v1589, %v1591
      %v1597 = vadd.f32 %v1573, %v1592
      %v1598 = vadd.f32 %v1574, %v1593
      %v1599 = vadd.f32 %v1575, %v1591
      %1600 = vset.pattern.permute.xlu0 94
      %1601 = vperm.xlu0 %1600, %v882
      %v1602 = vpop.permute.xlu0 %1601
      %v1604 = vmul.f32 %v1602, %v884
      %v1605 = vmul.f32 %v1602, %v885
      %v1606 = vmul.f32 %v1602, %v886
      %1610 = vrot.lane.b32.xlu0 %v1604, 124
      %v1611 = vpop.permute.xlu0 %1610
      %1612 = vrot.lane.b32.xlu0 %v1605, 124
      %v1613 = vpop.permute.xlu0 %1612
      %1614 = vrot.lane.b32.xlu0 %v1606, 124
      %v1615 = vpop.permute.xlu0 %1614
      %v1616 = vsel %vm984, %v1611, %v1613
      %v1617 = vsel %vm984, %v1613, %v1615
      %v1621 = vadd.f32 %v1597, %v1616
      %v1622 = vadd.f32 %v1598, %v1617
      %v1623 = vadd.f32 %v1599, %v1615
      %1624 = vset.pattern.permute.xlu0 95
      %1625 = vperm.xlu0 %1624, %v882
      %v1626 = vpop.permute.xlu0 %1625
      %v1628 = vmul.f32 %v1626, %v884
      %v1629 = vmul.f32 %v1626, %v885
      %v1630 = vmul.f32 %v1626, %v886
      %1634 = vrot.lane.b32.xlu0 %v1628, 123
      %v1635 = vpop.permute.xlu0 %1634
      %1636 = vrot.lane.b32.xlu0 %v1629, 123
      %v1637 = vpop.permute.xlu0 %1636
      %1638 = vrot.lane.b32.xlu0 %v1630, 123
      %v1639 = vpop.permute.xlu0 %1638
      %v1640 = vsel %vm1009, %v1635, %v1637
      %v1641 = vsel %vm1009, %v1637, %v1639
      %v1645 = vadd.f32 %v1621, %v1640
      %v1646 = vadd.f32 %v1622, %v1641
      %v1647 = vadd.f32 %v1623, %v1639
      %1651 = vrot.lane.b32.xlu0 %v1142, 110
      %v1652 = vpop.permute.xlu0 %1651
      %1653 = vrot.lane.b32.xlu0 %v1143, 110
      %v1654 = vpop.permute.xlu0 %1653
      %1655 = vrot.lane.b32.xlu0 %v1144, 110
      %v1656 = vpop.permute.xlu0 %1655
      %v1657 = vsel %vm549, %v1652, %v1654
      %v1658 = vsel %vm549, %v1654, %v1656
      %v1662 = vadd.f32 %v1015, %v1657
      %v1663 = vadd.f32 %v1016, %v1658
      %v1664 = vadd.f32 %v1017, %v1656
      %1668 = vrot.lane.b32.xlu0 %v1396, 110
      %v1669 = vpop.permute.xlu0 %1668
      %1670 = vrot.lane.b32.xlu0 %v1397, 110
      %v1671 = vpop.permute.xlu0 %1670
      %1672 = vrot.lane.b32.xlu0 %v1398, 110
      %v1673 = vpop.permute.xlu0 %1672
      %v1674 = vsel %vm549, %v1669, %v1671
      %v1675 = vsel %vm549, %v1671, %v1673
      %v1679 = vadd.f32 %v1269, %v1674
      %v1680 = vadd.f32 %v1270, %v1675
      %v1681 = vadd.f32 %v1271, %v1673
      %1685 = vrot.lane.b32.xlu0 %v1645, 110
      %v1686 = vpop.permute.xlu0 %1685
      %1687 = vrot.lane.b32.xlu0 %v1646, 110
      %v1688 = vpop.permute.xlu0 %1687
      %1689 = vrot.lane.b32.xlu0 %v1647, 110
      %v1690 = vpop.permute.xlu0 %1689
      %v1691 = vsel %vm549, %v1686, %v1688
      %v1692 = vsel %vm549, %v1688, %v1690
      %v1696 = vadd.f32 %v1518, %v1686
      %v1697 = vadd.f32 %v1519, %v1691
      %v1698 = vadd.f32 %v1520, %v1692
      %1702 = vrot.lane.b32.xlu0 %v1679, 92
      %v1703 = vpop.permute.xlu0 %1702
      %1704 = vrot.lane.b32.xlu0 %v1680, 92
      %v1705 = vpop.permute.xlu0 %1704
      %1706 = vrot.lane.b32.xlu0 %v1681, 92
      %v1707 = vpop.permute.xlu0 %1706
      %v1708 = vsel %vm609, %v1703, %v1705
      %v1709 = vsel %vm609, %v1705, %v1707
      %v1713 = vadd.f32 %v1662, %v1708
      %v1714 = vadd.f32 %v1663, %v1709
      %v1715 = vadd.f32 %v1664, %v1707
      %1719 = vrot.lane.b32.xlu0 %v1696, 56
      %v1720 = vpop.permute.xlu0 %1719
      %1721 = vrot.lane.b32.xlu0 %v1697, 56
      %v1722 = vpop.permute.xlu0 %1721
      %1723 = vrot.lane.b32.xlu0 %v1698, 56
      %v1724 = vpop.permute.xlu0 %1723
      %vm1725 = vcmask 457728
      %v1726 = vsel %vm1725, %v1720, %v1722
      %v1727 = vsel %vm1725, %v1722, %v1724
      %v1731 = vadd.f32 %v1713, %v1726
      %v1732 = vadd.f32 %v1714, %v1727
      %v1733 = vadd.f32 %v1715, %v1724
      %1737 = vrot.lane.b32.xlu0 %v1731, 76
      %v1738 = vpop.permute.xlu0 %1737
      %1739 = vrot.lane.b32.xlu0 %v1732, 76
      %v1740 = vpop.permute.xlu0 %1739
      %1741 = vrot.lane.b32.xlu0 %v1733, 76
      %v1742 = vpop.permute.xlu0 %1741
      %vm1743 = vcmask 621568
      %v1744 = vsel %vm1743, %v1738, %v1740
      %v1745 = vsel %vm1743, %v1740, %v1742
      %1748 = vst [vmem:[%s224] sm:$0xff] %v1744
      %1749 = vst [vmem:[%s224 + $0x8] sm:$0xff] %v1745
      %p1750 = scmp.lt.s32.totalorder %s16, 1
      %s1751 = scalar_select %p1750, %s16, 1
      %s1752 = smul.addr %s1751, 2
      %s1753 = smul.addr %s1752, 8
      %s1754 = scalar_lea.vmem %s5, %s1753
      // Predicated region
      $region41: #{siamese_forward.1} parent=39 // pred_check
        %p1755 = pneg %p144
      $region42: #{siamese_forward.1} parent=39 // pred_check_branch
        %1757 = sbr.rel (%p1755) target = $region44
      $region43: #{siamese_forward.1} parent=39 // pred_region
        _
      $region44: #{siamese_forward.1} parent=39 // pred_fallthru
        _
    $region40: #{siamese_forward.1} parent=5 // pred_fallthru
      _
    %p1758 = scmp.le.s32.totalorder 2, %s11
    // Predicated region
    $region45: #{siamese_forward.1} parent=5 // pred_check
      %p1759 = pneg %p1758
    $region46: #{siamese_forward.1} parent=5 // pred_check_branch
      %1761 = sbr.rel (%p1759) target = $region48
    $region47: #{siamese_forward.1} parent=5 // pred_region
      %s1762 = ssub.s32 %s11, 2
      // Predicated region
      $region49: #{siamese_forward.1} parent=47 // pred_check
        %p1763 = pneg %p150
      $region50: #{siamese_forward.1} parent=47 // pred_check_branch
        %1765 = sbr.rel (%p1763) target = $region52
      $region51: #{siamese_forward.1} parent=47 // pred_region
        %p1766 = scmp.lt.s32.totalorder %s17, 1
        %s1767 = scalar_select %p1766, %s17, 1
        %s1768 = smul.addr %s1767, 2
        %s1769 = smul.addr %s1768, 8
        %s1770 = scalar_lea.vmem %s5, %s1769
      $region52: #{siamese_forward.1} parent=47 // pred_fallthru
        _
    $region48: #{siamese_forward.1} parent=5 // pred_fallthru
      _
  $region6: #{siamese_forward.1} parent=0 // loop_footer
    %s15 = sadd.s32 1, %s11
  $region7: #{siamese_forward.1} parent=0 // loop_footer_branch
    %10 = sbr.rel target = $region3
  $region8: #{siamese_forward.1} parent=0 // loop_exit
    _

</llo_original>
